<compile_context>
chip_gen: v7x
topology: tpu7x:2x2x1
jax: 0.10.0
libtpu: 0.0.40
codegen_flags: <defaults>
</compile_context>

<pallas_src>
import jax
import jax.numpy as jnp
from jax.experimental import pallas as pl
from jax.experimental.pallas import tpu as pltpu

# Small, module-consistent shapes (vocab_size, embed_size, num_hiddens, num_layers)
V, E, H, L = 256, 32, 32, 2
B, T = 2, 8
G = 3 * H                      # packed gate width [r | z | n] = 96
COL0, COL1, COL2 = 0, 128, 256  # 128-aligned column blocks inside the packed RHS


def decoder_kernel(ids_ref, emb_gi_ref, state_ref, w_pre_ref, b_pre_ref,
                   w_rec_ref, b_rec_ref, wd_ref, bd_ref,
                   out_ref, state_out_ref):
    """ids_ref: (B, T) int32 in SMEM (scalar prefetch).

    emb_gi_ref:  (V, 1, G)  pre-multiplied embedding table (Emb @ W_ih0[:, :E].T)
    state_ref:   (L, B, H)  initial hidden state
    w_pre_ref:   (2H, 256)  rows[0:H] -> W_ih0_ctx^T at cols[0:G], rows[H:2H] -> W_hh0^T at cols[128:128+G]
    b_pre_ref:   (1, 256)   [b_ih0 @ 0:G, b_hh0 @ 128:128+G]
    w_rec_ref:   (2H, 384)  rows[0:H] -> {W_ih1^T @ 0:G, W_hh0^T @ 128:128+G}, rows[H:2H] -> W_hh1^T @ 256:256+G
    b_rec_ref:   (1, 384)   [b_ih1 @ 0:G, b_hh0 @ 128:128+G, b_hh1 @ 256:256+G]
    wd_ref:      (H, V), bd_ref: (1, V)
    """
    # ---- in-kernel embedding lookup: gathered rows ARE the x-side gate pre-activations ----
    gi_x = [jnp.concatenate([emb_gi_ref[ids_ref[b, t]] for b in range(B)], axis=0)
            for t in range(T)]                                     # T values of (B, G)

    # ---- prologue: one fused MXU call for the time-constant pieces ----
    h0 = state_ref[0]                      # (B, H)
    h1 = state_ref[1]                      # (B, H)
    ctx = h1                               # context = state[-1] (initial top-layer state)
    pre = jnp.dot(jnp.concatenate([ctx, h0], axis=1), w_pre_ref[...],
                  preferred_element_type=jnp.float32) + b_pre_ref[...]
    ctx_gi = pre[:, COL0:COL0 + G]         # ctx @ W_ih0_ctx^T + b_ih0 (constant over time)
    gh0 = pre[:, COL1:COL1 + G]            # h0_init @ W_hh0^T + b_hh0 (carry for step 0)

    # fold the constant context/bias contribution once, outside the recurrence
    gi0_all = [g + ctx_gi for g in gi_x]

    def gru_gates(gi, gh, h_prev):
        # PyTorch GRU gate packing [r | z | n]; r and z share one sigmoid (EUP) call.
        rz = jax.nn.sigmoid(gi[:, 0:2 * H] + gh[:, 0:2 * H])
        n = jnp.tanh(gi[:, 2 * H:G] + rz[:, 0:H] * gh[:, 2 * H:G])
        z = rz[:, H:2 * H]
        return (1.0 - z) * n + z * h_prev

    outs = []
    for t in range(T):                     # fully unrolled; the whole recurrence is one grid step
        # layer 0: x/ctx side precomputed; gh0 carried from the previous step's fused matmul
        h0 = gru_gates(gi0_all[t], gh0, h0)
        # single fused MXU call per step: [gi1(t) | gh0(t+1) | gh1(t)] (+ packed biases)
        fused = jnp.dot(jnp.concatenate([h0, h1], axis=1), w_rec_ref[...],
                        preferred_element_type=jnp.float32) + b_rec_ref[...]
        # layer 1 (dropout=0 -> no-op between layers)
        h1 = gru_gates(fused[:, COL0:COL0 + G], fused[:, COL2:COL2 + G], h1)
        gh0 = fused[:, COL1:COL1 + G]      # layer-0 h-side pre-activation for step t+1
        outs.append(h1)

    # ---- batched vocab projection: one (T*B, H) x (H, V) matmul, lane-dense output slab ----
    hs = jnp.concatenate(outs, axis=0)                             # (T*B, H), time-major rows
    out_ref[...] = jnp.dot(hs, wd_ref[...],
                           preferred_element_type=jnp.float32) + bd_ref[...]

    # final hidden state, written once
    state_out_ref[0] = h0
    state_out_ref[1] = h1


def init_params(key):
    ks = jax.random.split(key, 11)

    def u(k, shape, fan):
        bound = 1.0 / jnp.sqrt(jnp.float32(fan))
        return jax.random.uniform(k, shape, jnp.float32, -bound, bound)

    params = {"emb": jax.random.normal(ks[0], (V, E), jnp.float32) * 0.1}
    in0 = E + H
    params["wih0"] = u(ks[1], (3 * H, in0), H)
    params["whh0"] = u(ks[2], (3 * H, H), H)
    params["bih0"] = u(ks[3], (3 * H,), H)
    params["bhh0"] = u(ks[4], (3 * H,), H)
    params["wih1"] = u(ks[5], (3 * H, H), H)
    params["whh1"] = u(ks[6], (3 * H, H), H)
    params["bih1"] = u(ks[7], (3 * H,), H)
    params["bhh1"] = u(ks[8], (3 * H,), H)
    params["wd"] = u(ks[9], (V, H), H)
    params["bd"] = u(ks[10], (V,), H)
    return params


def pack_params(p):
    """One-time packing (hoisted out of the per-call forward)."""
    wih0 = p["wih0"]                              # (3H, E+H): cols [0:E] x-part, [E:] context-part
    emb_gi = (p["emb"] @ wih0[:, :E].T).reshape(V, 1, G)          # pre-multiplied lookup table

    w_pre = jnp.zeros((2 * H, 256), jnp.float32)                   # LHS = [ctx | h0_init]
    w_pre = w_pre.at[0:H, COL0:COL0 + G].set(wih0[:, E:].T)
    w_pre = w_pre.at[H:2 * H, COL1:COL1 + G].set(p["whh0"].T)
    b_pre = jnp.zeros((1, 256), jnp.float32)
    b_pre = b_pre.at[0, COL0:COL0 + G].set(p["bih0"])
    b_pre = b_pre.at[0, COL1:COL1 + G].set(p["bhh0"])

    w_rec = jnp.zeros((2 * H, 384), jnp.float32)                   # LHS = [h0(t) | h1(t-1)]
    w_rec = w_rec.at[0:H, COL0:COL0 + G].set(p["wih1"].T)
    w_rec = w_rec.at[0:H, COL1:COL1 + G].set(p["whh0"].T)
    w_rec = w_rec.at[H:2 * H, COL2:COL2 + G].set(p["whh1"].T)
    b_rec = jnp.zeros((1, 384), jnp.float32)
    b_rec = b_rec.at[0, COL0:COL0 + G].set(p["bih1"])
    b_rec = b_rec.at[0, COL1:COL1 + G].set(p["bhh0"])
    b_rec = b_rec.at[0, COL2:COL2 + G].set(p["bhh1"])

    return {"emb_gi": emb_gi, "w_pre": w_pre, "b_pre": b_pre,
            "w_rec": w_rec, "b_rec": b_rec,
            "wd": p["wd"].T, "bd": p["bd"].reshape(1, V)}


@jax.jit
def seq2seq_decoder_forward(packed, X, state):
    """X: (B, T) int32 tokens; state: (L, B, H) f32. Returns ((B, T, V), (L, B, H))."""
    ids = X.astype(jnp.int32)
    in_arrays = (packed["emb_gi"], state, packed["w_pre"], packed["b_pre"],
                 packed["w_rec"], packed["b_rec"], packed["wd"], packed["bd"])

    def full_spec(a):
        nd = a.ndim
        return pl.BlockSpec(a.shape, lambda i, ids_ref, _nd=nd: (0,) * _nd)

    logits_flat, state_out = pl.pallas_call(
        decoder_kernel,
        out_shape=(jax.ShapeDtypeStruct((T * B, V), jnp.float32),
                   jax.ShapeDtypeStruct((L, B, H), jnp.float32)),
        grid_spec=pltpu.PrefetchScalarGridSpec(
            num_scalar_prefetch=1,                 # token ids -> SMEM
            grid=(1,),                             # whole recurrence in one invocation
            in_specs=[full_spec(a) for a in in_arrays],
            out_specs=[pl.BlockSpec((T * B, V), lambda i, ids_ref: (0, 0)),
                       pl.BlockSpec((L, B, H), lambda i, ids_ref: (0, 0, 0))]),
        compiler_params=pltpu.CompilerParams(
            dimension_semantics=("arbitrary",)),
    )(ids, *in_arrays)

    # time-major (T*B, V) rows -> (B, T, V), matching PyTorch's .permute(1, 0, 2)
    output = jnp.transpose(logits_flat.reshape(T, B, V), (1, 0, 2))
    return output, state_out


def reference_forward(params, X, state):
    """Pure-JAX reference mirroring the PyTorch forward."""
    emb = params["emb"][X]
    x_tm = jnp.transpose(emb, (1, 0, 2))
    context = state[-1]

    def cell(x, h, wih, whh, bih, bhh):
        gi = x @ wih.T + bih
        gh = h @ whh.T + bhh
        r = jax.nn.sigmoid(gi[:, :H] + gh[:, :H])
        z = jax.nn.sigmoid(gi[:, H:2 * H] + gh[:, H:2 * H])
        n = jnp.tanh(gi[:, 2 * H:] + r * gh[:, 2 * H:])
        return (1.0 - z) * n + z * h

    def step(carry, x_t):
        h0, h1 = carry
        xc = jnp.concatenate([x_t, context], axis=-1)
        h0 = cell(xc, h0, params["wih0"], params["whh0"], params["bih0"], params["bhh0"])
        h1 = cell(h0, h1, params["wih1"], params["whh1"], params["bih1"], params["bhh1"])
        return (h0, h1), h1 @ params["wd"].T + params["bd"]

    (h0, h1), outs = jax.lax.scan(step, (state[0], state[1]), x_tm)
    return jnp.transpose(outs, (1, 0, 2)), jnp.stack([h0, h1])


if __name__ == "__main__":
    key = jax.random.PRNGKey(0)
    pkey, xkey, skey = jax.random.split(key, 3)
    params = init_params(pkey)
    packed = pack_params(params)        # one-time packing, hoisted out of the forward
    X = jax.random.randint(xkey, (B, T), 0, V, dtype=jnp.int32)
    state = jax.random.normal(skey, (L, B, H), jnp.float32)  # init_state = enc_outputs[1]

    out, new_state = seq2seq_decoder_forward(packed, X, state)
    out = jax.block_until_ready(out)
    new_state = jax.block_until_ready(new_state)

    ref_out, ref_state = reference_forward(params, X, state)
    assert out.shape == (B, T, V) and new_state.shape == (L, B, H)
    assert jnp.allclose(out, ref_out, atol=1e-4, rtol=1e-4)
    assert jnp.allclose(new_state, ref_state, atol=1e-4, rtol=1e-4)
    print("KERNEL_OK")
</pallas_src>

<mosaic_0001>
module attributes {stable_mosaic.version = 11 : i64} {
  func.func @decoder_kernel(%arg0: i32, %arg1: memref<2x8xi32, #tpu.memory_space<smem>>, %arg2: memref<256x1x96xf32, #tpu.memory_space<vmem>>, %arg3: memref<2x2x32xf32, #tpu.memory_space<vmem>>, %arg4: memref<64x256xf32, #tpu.memory_space<vmem>>, %arg5: memref<1x256xf32, #tpu.memory_space<vmem>>, %arg6: memref<64x384xf32, #tpu.memory_space<vmem>>, %arg7: memref<1x384xf32, #tpu.memory_space<vmem>>, %arg8: memref<32x256xf32, #tpu.memory_space<vmem>>, %arg9: memref<1x256xf32, #tpu.memory_space<vmem>>, %arg10: memref<16x256xf32, #tpu.memory_space<vmem>>, %arg11: memref<2x2x32xf32, #tpu.memory_space<vmem>>) attributes {dimension_semantics = [#tpu.dimension_semantics<arbitrary>], iteration_bounds = array<i64: 1>, scalar_prefetch = 1 : i64, scratch_operands = 0 : i64, tpu.core_type = #tpu.core_type<tc>, window_params = [{pipeline_mode = #tpu.pipeline_mode<synchronous>, transform_indices = @transform_0, window_bounds = array<i64: 256, 1, 96>}, {pipeline_mode = #tpu.pipeline_mode<synchronous>, transform_indices = @transform_1, window_bounds = array<i64: 2, 2, 32>}, {pipeline_mode = #tpu.pipeline_mode<synchronous>, transform_indices = @transform_2, window_bounds = array<i64: 64, 256>}, {pipeline_mode = #tpu.pipeline_mode<synchronous>, transform_indices = @transform_3, window_bounds = array<i64: 1, 256>}, {pipeline_mode = #tpu.pipeline_mode<synchronous>, transform_indices = @transform_4, window_bounds = array<i64: 64, 384>}, {pipeline_mode = #tpu.pipeline_mode<synchronous>, transform_indices = @transform_5, window_bounds = array<i64: 1, 384>}, {pipeline_mode = #tpu.pipeline_mode<synchronous>, transform_indices = @transform_6, window_bounds = array<i64: 32, 256>}, {pipeline_mode = #tpu.pipeline_mode<synchronous>, transform_indices = @transform_7, window_bounds = array<i64: 1, 256>}, {pipeline_mode = #tpu.pipeline_mode<synchronous>, transform_indices = @transform_8, window_bounds = array<i64: 16, 256>}, {pipeline_mode = #tpu.pipeline_mode<synchronous>, transform_indices = @transform_9, window_bounds = array<i64: 2, 2, 32>}]} {
    %c0 = arith.constant 0 : index
    %c0_0 = arith.constant 0 : index
    %0 = memref.load %arg1[%c0, %c0_0] : memref<2x8xi32, #tpu.memory_space<smem>>
    %1 = arith.index_cast %0 : i32 to index
    %c0_1 = arith.constant 0 : index
    %c0_2 = arith.constant 0 : index
    %2 = vector.load %arg2[%1, %c0_1, %c0_2] : memref<256x1x96xf32, #tpu.memory_space<vmem>>, vector<1x1x96xf32>
    %3 = vector.shape_cast %2 : vector<1x1x96xf32> to vector<1x96xf32>
    %c1 = arith.constant 1 : index
    %c0_3 = arith.constant 0 : index
    %4 = memref.load %arg1[%c1, %c0_3] : memref<2x8xi32, #tpu.memory_space<smem>>
    %5 = arith.index_cast %4 : i32 to index
    %c0_4 = arith.constant 0 : index
    %c0_5 = arith.constant 0 : index
    %6 = vector.load %arg2[%5, %c0_4, %c0_5] : memref<256x1x96xf32, #tpu.memory_space<vmem>>, vector<1x1x96xf32>
    %7 = vector.shape_cast %6 : vector<1x1x96xf32> to vector<1x96xf32>
    %8 = tpu.concatenate %3, %7 in 0 : vector<1x96xf32>, vector<1x96xf32> -> vector<2x96xf32>
    %c0_6 = arith.constant 0 : index
    %c1_7 = arith.constant 1 : index
    %9 = memref.load %arg1[%c0_6, %c1_7] : memref<2x8xi32, #tpu.memory_space<smem>>
    %10 = arith.index_cast %9 : i32 to index
    %c0_8 = arith.constant 0 : index
    %c0_9 = arith.constant 0 : index
    %11 = vector.load %arg2[%10, %c0_8, %c0_9] : memref<256x1x96xf32, #tpu.memory_space<vmem>>, vector<1x1x96xf32>
    %12 = vector.shape_cast %11 : vector<1x1x96xf32> to vector<1x96xf32>
    %c1_10 = arith.constant 1 : index
    %c1_11 = arith.constant 1 : index
    %13 = memref.load %arg1[%c1_10, %c1_11] : memref<2x8xi32, #tpu.memory_space<smem>>
    %14 = arith.index_cast %13 : i32 to index
    %c0_12 = arith.constant 0 : index
    %c0_13 = arith.constant 0 : index
    %15 = vector.load %arg2[%14, %c0_12, %c0_13] : memref<256x1x96xf32, #tpu.memory_space<vmem>>, vector<1x1x96xf32>
    %16 = vector.shape_cast %15 : vector<1x1x96xf32> to vector<1x96xf32>
    %17 = tpu.concatenate %12, %16 in 0 : vector<1x96xf32>, vector<1x96xf32> -> vector<2x96xf32>
    %c0_14 = arith.constant 0 : index
    %c2 = arith.constant 2 : index
    %18 = memref.load %arg1[%c0_14, %c2] : memref<2x8xi32, #tpu.memory_space<smem>>
    %19 = arith.index_cast %18 : i32 to index
    %c0_15 = arith.constant 0 : index
    %c0_16 = arith.constant 0 : index
    %20 = vector.load %arg2[%19, %c0_15, %c0_16] : memref<256x1x96xf32, #tpu.memory_space<vmem>>, vector<1x1x96xf32>
    %21 = vector.shape_cast %20 : vector<1x1x96xf32> to vector<1x96xf32>
    %c1_17 = arith.constant 1 : index
    %c2_18 = arith.constant 2 : index
    %22 = memref.load %arg1[%c1_17, %c2_18] : memref<2x8xi32, #tpu.memory_space<smem>>
    %23 = arith.index_cast %22 : i32 to index
    %c0_19 = arith.constant 0 : index
    %c0_20 = arith.constant 0 : index
    %24 = vector.load %arg2[%23, %c0_19, %c0_20] : memref<256x1x96xf32, #tpu.memory_space<vmem>>, vector<1x1x96xf32>
    %25 = vector.shape_cast %24 : vector<1x1x96xf32> to vector<1x96xf32>
    %26 = tpu.concatenate %21, %25 in 0 : vector<1x96xf32>, vector<1x96xf32> -> vector<2x96xf32>
    %c0_21 = arith.constant 0 : index
    %c3 = arith.constant 3 : index
    %27 = memref.load %arg1[%c0_21, %c3] : memref<2x8xi32, #tpu.memory_space<smem>>
    %28 = arith.index_cast %27 : i32 to index
    %c0_22 = arith.constant 0 : index
    %c0_23 = arith.constant 0 : index
    %29 = vector.load %arg2[%28, %c0_22, %c0_23] : memref<256x1x96xf32, #tpu.memory_space<vmem>>, vector<1x1x96xf32>
    %30 = vector.shape_cast %29 : vector<1x1x96xf32> to vector<1x96xf32>
    %c1_24 = arith.constant 1 : index
    %c3_25 = arith.constant 3 : index
    %31 = memref.load %arg1[%c1_24, %c3_25] : memref<2x8xi32, #tpu.memory_space<smem>>
    %32 = arith.index_cast %31 : i32 to index
    %c0_26 = arith.constant 0 : index
    %c0_27 = arith.constant 0 : index
    %33 = vector.load %arg2[%32, %c0_26, %c0_27] : memref<256x1x96xf32, #tpu.memory_space<vmem>>, vector<1x1x96xf32>
    %34 = vector.shape_cast %33 : vector<1x1x96xf32> to vector<1x96xf32>
    %35 = tpu.concatenate %30, %34 in 0 : vector<1x96xf32>, vector<1x96xf32> -> vector<2x96xf32>
    %c0_28 = arith.constant 0 : index
    %c4 = arith.constant 4 : index
    %36 = memref.load %arg1[%c0_28, %c4] : memref<2x8xi32, #tpu.memory_space<smem>>
    %37 = arith.index_cast %36 : i32 to index
    %c0_29 = arith.constant 0 : index
    %c0_30 = arith.constant 0 : index
    %38 = vector.load %arg2[%37, %c0_29, %c0_30] : memref<256x1x96xf32, #tpu.memory_space<vmem>>, vector<1x1x96xf32>
    %39 = vector.shape_cast %38 : vector<1x1x96xf32> to vector<1x96xf32>
    %c1_31 = arith.constant 1 : index
    %c4_32 = arith.constant 4 : index
    %40 = memref.load %arg1[%c1_31, %c4_32] : memref<2x8xi32, #tpu.memory_space<smem>>
    %41 = arith.index_cast %40 : i32 to index
    %c0_33 = arith.constant 0 : index
    %c0_34 = arith.constant 0 : index
    %42 = vector.load %arg2[%41, %c0_33, %c0_34] : memref<256x1x96xf32, #tpu.memory_space<vmem>>, vector<1x1x96xf32>
    %43 = vector.shape_cast %42 : vector<1x1x96xf32> to vector<1x96xf32>
    %44 = tpu.concatenate %39, %43 in 0 : vector<1x96xf32>, vector<1x96xf32> -> vector<2x96xf32>
    %c0_35 = arith.constant 0 : index
    %c5 = arith.constant 5 : index
    %45 = memref.load %arg1[%c0_35, %c5] : memref<2x8xi32, #tpu.memory_space<smem>>
    %46 = arith.index_cast %45 : i32 to index
    %c0_36 = arith.constant 0 : index
    %c0_37 = arith.constant 0 : index
    %47 = vector.load %arg2[%46, %c0_36, %c0_37] : memref<256x1x96xf32, #tpu.memory_space<vmem>>, vector<1x1x96xf32>
    %48 = vector.shape_cast %47 : vector<1x1x96xf32> to vector<1x96xf32>
    %c1_38 = arith.constant 1 : index
    %c5_39 = arith.constant 5 : index
    %49 = memref.load %arg1[%c1_38, %c5_39] : memref<2x8xi32, #tpu.memory_space<smem>>
    %50 = arith.index_cast %49 : i32 to index
    %c0_40 = arith.constant 0 : index
    %c0_41 = arith.constant 0 : index
    %51 = vector.load %arg2[%50, %c0_40, %c0_41] : memref<256x1x96xf32, #tpu.memory_space<vmem>>, vector<1x1x96xf32>
    %52 = vector.shape_cast %51 : vector<1x1x96xf32> to vector<1x96xf32>
    %53 = tpu.concatenate %48, %52 in 0 : vector<1x96xf32>, vector<1x96xf32> -> vector<2x96xf32>
    %c0_42 = arith.constant 0 : index
    %c6 = arith.constant 6 : index
    %54 = memref.load %arg1[%c0_42, %c6] : memref<2x8xi32, #tpu.memory_space<smem>>
    %55 = arith.index_cast %54 : i32 to index
    %c0_43 = arith.constant 0 : index
    %c0_44 = arith.constant 0 : index
    %56 = vector.load %arg2[%55, %c0_43, %c0_44] : memref<256x1x96xf32, #tpu.memory_space<vmem>>, vector<1x1x96xf32>
    %57 = vector.shape_cast %56 : vector<1x1x96xf32> to vector<1x96xf32>
    %c1_45 = arith.constant 1 : index
    %c6_46 = arith.constant 6 : index
    %58 = memref.load %arg1[%c1_45, %c6_46] : memref<2x8xi32, #tpu.memory_space<smem>>
    %59 = arith.index_cast %58 : i32 to index
    %c0_47 = arith.constant 0 : index
    %c0_48 = arith.constant 0 : index
    %60 = vector.load %arg2[%59, %c0_47, %c0_48] : memref<256x1x96xf32, #tpu.memory_space<vmem>>, vector<1x1x96xf32>
    %61 = vector.shape_cast %60 : vector<1x1x96xf32> to vector<1x96xf32>
    %62 = tpu.concatenate %57, %61 in 0 : vector<1x96xf32>, vector<1x96xf32> -> vector<2x96xf32>
    %c0_49 = arith.constant 0 : index
    %c7 = arith.constant 7 : index
    %63 = memref.load %arg1[%c0_49, %c7] : memref<2x8xi32, #tpu.memory_space<smem>>
    %64 = arith.index_cast %63 : i32 to index
    %c0_50 = arith.constant 0 : index
    %c0_51 = arith.constant 0 : index
    %65 = vector.load %arg2[%64, %c0_50, %c0_51] : memref<256x1x96xf32, #tpu.memory_space<vmem>>, vector<1x1x96xf32>
    %66 = vector.shape_cast %65 : vector<1x1x96xf32> to vector<1x96xf32>
    %c1_52 = arith.constant 1 : index
    %c7_53 = arith.constant 7 : index
    %67 = memref.load %arg1[%c1_52, %c7_53] : memref<2x8xi32, #tpu.memory_space<smem>>
    %68 = arith.index_cast %67 : i32 to index
    %c0_54 = arith.constant 0 : index
    %c0_55 = arith.constant 0 : index
    %69 = vector.load %arg2[%68, %c0_54, %c0_55] : memref<256x1x96xf32, #tpu.memory_space<vmem>>, vector<1x1x96xf32>
    %70 = vector.shape_cast %69 : vector<1x1x96xf32> to vector<1x96xf32>
    %71 = tpu.concatenate %66, %70 in 0 : vector<1x96xf32>, vector<1x96xf32> -> vector<2x96xf32>
    %c0_56 = arith.constant 0 : index
    %c0_57 = arith.constant 0 : index
    %c0_58 = arith.constant 0 : index
    %72 = vector.load %arg3[%c0_56, %c0_57, %c0_58] : memref<2x2x32xf32, #tpu.memory_space<vmem>>, vector<1x2x32xf32>
    %73 = vector.shape_cast %72 : vector<1x2x32xf32> to vector<2x32xf32>
    %c1_59 = arith.constant 1 : index
    %c0_60 = arith.constant 0 : index
    %c0_61 = arith.constant 0 : index
    %74 = vector.load %arg3[%c1_59, %c0_60, %c0_61] : memref<2x2x32xf32, #tpu.memory_space<vmem>>, vector<1x2x32xf32>
    %75 = vector.shape_cast %74 : vector<1x2x32xf32> to vector<2x32xf32>
    %76 = tpu.concatenate %75, %73 in 1 : vector<2x32xf32>, vector<2x32xf32> -> vector<2x64xf32>
    %c0_62 = arith.constant 0 : index
    %c0_63 = arith.constant 0 : index
    %77 = vector.load %arg4[%c0_62, %c0_63] : memref<64x256xf32, #tpu.memory_space<vmem>>, vector<64x256xf32>
    %cst = arith.constant dense<0.000000e+00> : vector<2x256xf32>
    %78 = tpu.matmul %76, %77, %cst {dimension_numbers = #tpu.dot_dimension_numbers<[1], [0], [0], [1], [0, 0, 1, 1], [], []>} : vector<2x64xf32>, vector<64x256xf32>, vector<2x256xf32> -> vector<2x256xf32>
    %c0_64 = arith.constant 0 : index
    %c0_65 = arith.constant 0 : index
    %79 = vector.load %arg5[%c0_64, %c0_65] : memref<1x256xf32, #tpu.memory_space<vmem>>, vector<1x256xf32>
    %80 = vector.broadcast %79 : vector<1x256xf32> to vector<2x256xf32>
    %81 = arith.addf %78, %80 : vector<2x256xf32>
    %82 = vector.extract_strided_slice %81 {offsets = [0, 0], sizes = [2, 96], strides = [1, 1]} : vector<2x256xf32> to vector<2x96xf32>
    %83 = vector.extract_strided_slice %81 {offsets = [0, 128], sizes = [2, 96], strides = [1, 1]} : vector<2x256xf32> to vector<2x96xf32>
    %84 = arith.addf %8, %82 : vector<2x96xf32>
    %85 = arith.addf %17, %82 : vector<2x96xf32>
    %86 = arith.addf %26, %82 : vector<2x96xf32>
    %87 = arith.addf %35, %82 : vector<2x96xf32>
    %88 = arith.addf %44, %82 : vector<2x96xf32>
    %89 = arith.addf %53, %82 : vector<2x96xf32>
    %90 = arith.addf %62, %82 : vector<2x96xf32>
    %91 = arith.addf %71, %82 : vector<2x96xf32>
    %92 = vector.extract_strided_slice %84 {offsets = [0, 0], sizes = [2, 64], strides = [1, 1]} : vector<2x96xf32> to vector<2x64xf32>
    %93 = vector.extract_strided_slice %83 {offsets = [0, 0], sizes = [2, 64], strides = [1, 1]} : vector<2x96xf32> to vector<2x64xf32>
    %94 = arith.addf %92, %93 : vector<2x64xf32>
    %95 = arith.negf %94 : vector<2x64xf32>
    %96 = math.exp %95 : vector<2x64xf32>
    %cst_66 = arith.constant 1.000000e+00 : f32
    %97 = vector.broadcast %cst_66 : f32 to vector<2x64xf32>
    %98 = arith.addf %97, %96 : vector<2x64xf32>
    %99 = arith.divf %97, %98 : vector<2x64xf32>
    %100 = vector.extract_strided_slice %84 {offsets = [0, 64], sizes = [2, 32], strides = [1, 1]} : vector<2x96xf32> to vector<2x32xf32>
    %101 = vector.extract_strided_slice %99 {offsets = [0, 0], sizes = [2, 32], strides = [1, 1]} : vector<2x64xf32> to vector<2x32xf32>
    %102 = vector.extract_strided_slice %83 {offsets = [0, 64], sizes = [2, 32], strides = [1, 1]} : vector<2x96xf32> to vector<2x32xf32>
    %103 = arith.mulf %101, %102 : vector<2x32xf32>
    %104 = arith.addf %100, %103 : vector<2x32xf32>
    %105 = math.tanh %104 : vector<2x32xf32>
    %106 = vector.extract_strided_slice %99 {offsets = [0, 32], sizes = [2, 32], strides = [1, 1]} : vector<2x64xf32> to vector<2x32xf32>
    %cst_67 = arith.constant 1.000000e+00 : f32
    %107 = vector.broadcast %cst_67 : f32 to vector<2x32xf32>
    %108 = arith.subf %107, %106 : vector<2x32xf32>
    %109 = arith.mulf %108, %105 : vector<2x32xf32>
    %110 = arith.mulf %106, %73 : vector<2x32xf32>
    %111 = arith.addf %109, %110 : vector<2x32xf32>
    %112 = tpu.concatenate %111, %75 in 1 : vector<2x32xf32>, vector<2x32xf32> -> vector<2x64xf32>
    %c0_68 = arith.constant 0 : index
    %c0_69 = arith.constant 0 : index
    %113 = vector.load %arg6[%c0_68, %c0_69] : memref<64x384xf32, #tpu.memory_space<vmem>>, vector<64x384xf32>
    %cst_70 = arith.constant dense<0.000000e+00> : vector<2x384xf32>
    %114 = tpu.matmul %112, %113, %cst_70 {dimension_numbers = #tpu.dot_dimension_numbers<[1], [0], [0], [1], [0, 0, 1, 1], [], []>} : vector<2x64xf32>, vector<64x384xf32>, vector<2x384xf32> -> vector<2x384xf32>
    %c0_71 = arith.constant 0 : index
    %c0_72 = arith.constant 0 : index
    %115 = vector.load %arg7[%c0_71, %c0_72] : memref<1x384xf32, #tpu.memory_space<vmem>>, vector<1x384xf32>
    %116 = vector.broadcast %115 : vector<1x384xf32> to vector<2x384xf32>
    %117 = arith.addf %114, %116 : vector<2x384xf32>
    %118 = vector.extract_strided_slice %117 {offsets = [0, 0], sizes = [2, 96], strides = [1, 1]} : vector<2x384xf32> to vector<2x96xf32>
    %119 = vector.extract_strided_slice %117 {offsets = [0, 256], sizes = [2, 96], strides = [1, 1]} : vector<2x384xf32> to vector<2x96xf32>
    %120 = vector.extract_strided_slice %118 {offsets = [0, 0], sizes = [2, 64], strides = [1, 1]} : vector<2x96xf32> to vector<2x64xf32>
    %121 = vector.extract_strided_slice %119 {offsets = [0, 0], sizes = [2, 64], strides = [1, 1]} : vector<2x96xf32> to vector<2x64xf32>
    %122 = arith.addf %120, %121 : vector<2x64xf32>
    %123 = arith.negf %122 : vector<2x64xf32>
    %124 = math.exp %123 : vector<2x64xf32>
    %cst_73 = arith.constant 1.000000e+00 : f32
    %125 = vector.broadcast %cst_73 : f32 to vector<2x64xf32>
    %126 = arith.addf %125, %124 : vector<2x64xf32>
    %127 = arith.divf %125, %126 : vector<2x64xf32>
    %128 = vector.extract_strided_slice %118 {offsets = [0, 64], sizes = [2, 32], strides = [1, 1]} : vector<2x96xf32> to vector<2x32xf32>
    %129 = vector.extract_strided_slice %127 {offsets = [0, 0], sizes = [2, 32], strides = [1, 1]} : vector<2x64xf32> to vector<2x32xf32>
    %130 = vector.extract_strided_slice %119 {offsets = [0, 64], sizes = [2, 32], strides = [1, 1]} : vector<2x96xf32> to vector<2x32xf32>
    %131 = arith.mulf %129, %130 : vector<2x32xf32>
    %132 = arith.addf %128, %131 : vector<2x32xf32>
    %133 = math.tanh %132 : vector<2x32xf32>
    %134 = vector.extract_strided_slice %127 {offsets = [0, 32], sizes = [2, 32], strides = [1, 1]} : vector<2x64xf32> to vector<2x32xf32>
    %cst_74 = arith.constant 1.000000e+00 : f32
    %135 = vector.broadcast %cst_74 : f32 to vector<2x32xf32>
    %136 = arith.subf %135, %134 : vector<2x32xf32>
    %137 = arith.mulf %136, %133 : vector<2x32xf32>
    %138 = arith.mulf %134, %75 : vector<2x32xf32>
    %139 = arith.addf %137, %138 : vector<2x32xf32>
    %140 = vector.extract_strided_slice %117 {offsets = [0, 128], sizes = [2, 96], strides = [1, 1]} : vector<2x384xf32> to vector<2x96xf32>
    %141 = vector.extract_strided_slice %85 {offsets = [0, 0], sizes = [2, 64], strides = [1, 1]} : vector<2x96xf32> to vector<2x64xf32>
    %142 = vector.extract_strided_slice %140 {offsets = [0, 0], sizes = [2, 64], strides = [1, 1]} : vector<2x96xf32> to vector<2x64xf32>
    %143 = arith.addf %141, %142 : vector<2x64xf32>
    %144 = arith.negf %143 : vector<2x64xf32>
    %145 = math.exp %144 : vector<2x64xf32>
    %cst_75 = arith.constant 1.000000e+00 : f32
    %146 = vector.broadcast %cst_75 : f32 to vector<2x64xf32>
    %147 = arith.addf %146, %145 : vector<2x64xf32>
    %148 = arith.divf %146, %147 : vector<2x64xf32>
    %149 = vector.extract_strided_slice %85 {offsets = [0, 64], sizes = [2, 32], strides = [1, 1]} : vector<2x96xf32> to vector<2x32xf32>
    %150 = vector.extract_strided_slice %148 {offsets = [0, 0], sizes = [2, 32], strides = [1, 1]} : vector<2x64xf32> to vector<2x32xf32>
    %151 = vector.extract_strided_slice %140 {offsets = [0, 64], sizes = [2, 32], strides = [1, 1]} : vector<2x96xf32> to vector<2x32xf32>
    %152 = arith.mulf %150, %151 : vector<2x32xf32>
    %153 = arith.addf %149, %152 : vector<2x32xf32>
    %154 = math.tanh %153 : vector<2x32xf32>
    %155 = vector.extract_strided_slice %148 {offsets = [0, 32], sizes = [2, 32], strides = [1, 1]} : vector<2x64xf32> to vector<2x32xf32>
    %cst_76 = arith.constant 1.000000e+00 : f32
    %156 = vector.broadcast %cst_76 : f32 to vector<2x32xf32>
    %157 = arith.subf %156, %155 : vector<2x32xf32>
    %158 = arith.mulf %157, %154 : vector<2x32xf32>
    %159 = arith.mulf %155, %111 : vector<2x32xf32>
    %160 = arith.addf %158, %159 : vector<2x32xf32>
    %161 = tpu.concatenate %160, %139 in 1 : vector<2x32xf32>, vector<2x32xf32> -> vector<2x64xf32>
    %c0_77 = arith.constant 0 : index
    %c0_78 = arith.constant 0 : index
    %162 = vector.load %arg6[%c0_77, %c0_78] : memref<64x384xf32, #tpu.memory_space<vmem>>, vector<64x384xf32>
    %cst_79 = arith.constant dense<0.000000e+00> : vector<2x384xf32>
    %163 = tpu.matmul %161, %162, %cst_79 {dimension_numbers = #tpu.dot_dimension_numbers<[1], [0], [0], [1], [0, 0, 1, 1], [], []>} : vector<2x64xf32>, vector<64x384xf32>, vector<2x384xf32> -> vector<2x384xf32>
    %c0_80 = arith.constant 0 : index
    %c0_81 = arith.constant 0 : index
    %164 = vector.load %arg7[%c0_80, %c0_81] : memref<1x384xf32, #tpu.memory_space<vmem>>, vector<1x384xf32>
    %165 = vector.broadcast %164 : vector<1x384xf32> to vector<2x384xf32>
    %166 = arith.addf %163, %165 : vector<2x384xf32>
    %167 = vector.extract_strided_slice %166 {offsets = [0, 0], sizes = [2, 96], strides = [1, 1]} : vector<2x384xf32> to vector<2x96xf32>
    %168 = vector.extract_strided_slice %166 {offsets = [0, 256], sizes = [2, 96], strides = [1, 1]} : vector<2x384xf32> to vector<2x96xf32>
    %169 = vector.extract_strided_slice %167 {offsets = [0, 0], sizes = [2, 64], strides = [1, 1]} : vector<2x96xf32> to vector<2x64xf32>
    %170 = vector.extract_strided_slice %168 {offsets = [0, 0], sizes = [2, 64], strides = [1, 1]} : vector<2x96xf32> to vector<2x64xf32>
    %171 = arith.addf %169, %170 : vector<2x64xf32>
    %172 = arith.negf %171 : vector<2x64xf32>
    %173 = math.exp %172 : vector<2x64xf32>
    %cst_82 = arith.constant 1.000000e+00 : f32
    %174 = vector.broadcast %cst_82 : f32 to vector<2x64xf32>
    %175 = arith.addf %174, %173 : vector<2x64xf32>
    %176 = arith.divf %174, %175 : vector<2x64xf32>
    %177 = vector.extract_strided_slice %167 {offsets = [0, 64], sizes = [2, 32], strides = [1, 1]} : vector<2x96xf32> to vector<2x32xf32>
    %178 = vector.extract_strided_slice %176 {offsets = [0, 0], sizes = [2, 32], strides = [1, 1]} : vector<2x64xf32> to vector<2x32xf32>
    %179 = vector.extract_strided_slice %168 {offsets = [0, 64], sizes = [2, 32], strides = [1, 1]} : vector<2x96xf32> to vector<2x32xf32>
    %180 = arith.mulf %178, %179 : vector<2x32xf32>
    %181 = arith.addf %177, %180 : vector<2x32xf32>
    %182 = math.tanh %181 : vector<2x32xf32>
    %183 = vector.extract_strided_slice %176 {offsets = [0, 32], sizes = [2, 32], strides = [1, 1]} : vector<2x64xf32> to vector<2x32xf32>
    %cst_83 = arith.constant 1.000000e+00 : f32
    %184 = vector.broadcast %cst_83 : f32 to vector<2x32xf32>
    %185 = arith.subf %184, %183 : vector<2x32xf32>
    %186 = arith.mulf %185, %182 : vector<2x32xf32>
    %187 = arith.mulf %183, %139 : vector<2x32xf32>
    %188 = arith.addf %186, %187 : vector<2x32xf32>
    %189 = vector.extract_strided_slice %166 {offsets = [0, 128], sizes = [2, 96], strides = [1, 1]} : vector<2x384xf32> to vector<2x96xf32>
    %190 = vector.extract_strided_slice %86 {offsets = [0, 0], sizes = [2, 64], strides = [1, 1]} : vector<2x96xf32> to vector<2x64xf32>
    %191 = vector.extract_strided_slice %189 {offsets = [0, 0], sizes = [2, 64], strides = [1, 1]} : vector<2x96xf32> to vector<2x64xf32>
    %192 = arith.addf %190, %191 : vector<2x64xf32>
    %193 = arith.negf %192 : vector<2x64xf32>
    %194 = math.exp %193 : vector<2x64xf32>
    %cst_84 = arith.constant 1.000000e+00 : f32
    %195 = vector.broadcast %cst_84 : f32 to vector<2x64xf32>
    %196 = arith.addf %195, %194 : vector<2x64xf32>
    %197 = arith.divf %195, %196 : vector<2x64xf32>
    %198 = vector.extract_strided_slice %86 {offsets = [0, 64], sizes = [2, 32], strides = [1, 1]} : vector<2x96xf32> to vector<2x32xf32>
    %199 = vector.extract_strided_slice %197 {offsets = [0, 0], sizes = [2, 32], strides = [1, 1]} : vector<2x64xf32> to vector<2x32xf32>
    %200 = vector.extract_strided_slice %189 {offsets = [0, 64], sizes = [2, 32], strides = [1, 1]} : vector<2x96xf32> to vector<2x32xf32>
    %201 = arith.mulf %199, %200 : vector<2x32xf32>
    %202 = arith.addf %198, %201 : vector<2x32xf32>
    %203 = math.tanh %202 : vector<2x32xf32>
    %204 = vector.extract_strided_slice %197 {offsets = [0, 32], sizes = [2, 32], strides = [1, 1]} : vector<2x64xf32> to vector<2x32xf32>
    %cst_85 = arith.constant 1.000000e+00 : f32
    %205 = vector.broadcast %cst_85 : f32 to vector<2x32xf32>
    %206 = arith.subf %205, %204 : vector<2x32xf32>
    %207 = arith.mulf %206, %203 : vector<2x32xf32>
    %208 = arith.mulf %204, %160 : vector<2x32xf32>
    %209 = arith.addf %207, %208 : vector<2x32xf32>
    %210 = tpu.concatenate %209, %188 in 1 : vector<2x32xf32>, vector<2x32xf32> -> vector<2x64xf32>
    %c0_86 = arith.constant 0 : index
    %c0_87 = arith.constant 0 : index
    %211 = vector.load %arg6[%c0_86, %c0_87] : memref<64x384xf32, #tpu.memory_space<vmem>>, vector<64x384xf32>
    %cst_88 = arith.constant dense<0.000000e+00> : vector<2x384xf32>
    %212 = tpu.matmul %210, %211, %cst_88 {dimension_numbers = #tpu.dot_dimension_numbers<[1], [0], [0], [1], [0, 0, 1, 1], [], []>} : vector<2x64xf32>, vector<64x384xf32>, vector<2x384xf32> -> vector<2x384xf32>
    %c0_89 = arith.constant 0 : index
    %c0_90 = arith.constant 0 : index
    %213 = vector.load %arg7[%c0_89, %c0_90] : memref<1x384xf32, #tpu.memory_space<vmem>>, vector<1x384xf32>
    %214 = vector.broadcast %213 : vector<1x384xf32> to vector<2x384xf32>
    %215 = arith.addf %212, %214 : vector<2x384xf32>
    %216 = vector.extract_strided_slice %215 {offsets = [0, 0], sizes = [2, 96], strides = [1, 1]} : vector<2x384xf32> to vector<2x96xf32>
    %217 = vector.extract_strided_slice %215 {offsets = [0, 256], sizes = [2, 96], strides = [1, 1]} : vector<2x384xf32> to vector<2x96xf32>
    %218 = vector.extract_strided_slice %216 {offsets = [0, 0], sizes = [2, 64], strides = [1, 1]} : vector<2x96xf32> to vector<2x64xf32>
    %219 = vector.extract_strided_slice %217 {offsets = [0, 0], sizes = [2, 64], strides = [1, 1]} : vector<2x96xf32> to vector<2x64xf32>
    %220 = arith.addf %218, %219 : vector<2x64xf32>
    %221 = arith.negf %220 : vector<2x64xf32>
    %222 = math.exp %221 : vector<2x64xf32>
    %cst_91 = arith.constant 1.000000e+00 : f32
    %223 = vector.broadcast %cst_91 : f32 to vector<2x64xf32>
    %224 = arith.addf %223, %222 : vector<2x64xf32>
    %225 = arith.divf %223, %224 : vector<2x64xf32>
    %226 = vector.extract_strided_slice %216 {offsets = [0, 64], sizes = [2, 32], strides = [1, 1]} : vector<2x96xf32> to vector<2x32xf32>
    %227 = vector.extract_strided_slice %225 {offsets = [0, 0], sizes = [2, 32], strides = [1, 1]} : vector<2x64xf32> to vector<2x32xf32>
    %228 = vector.extract_strided_slice %217 {offsets = [0, 64], sizes = [2, 32], strides = [1, 1]} : vector<2x96xf32> to vector<2x32xf32>
    %229 = arith.mulf %227, %228 : vector<2x32xf32>
    %230 = arith.addf %226, %229 : vector<2x32xf32>
    %231 = math.tanh %230 : vector<2x32xf32>
    %232 = vector.extract_strided_slice %225 {offsets = [0, 32], sizes = [2, 32], strides = [1, 1]} : vector<2x64xf32> to vector<2x32xf32>
    %cst_92 = arith.constant 1.000000e+00 : f32
    %233 = vector.broadcast %cst_92 : f32 to vector<2x32xf32>
    %234 = arith.subf %233, %232 : vector<2x32xf32>
    %235 = arith.mulf %234, %231 : vector<2x32xf32>
    %236 = arith.mulf %232, %188 : vector<2x32xf32>
    %237 = arith.addf %235, %236 : vector<2x32xf32>
    %238 = vector.extract_strided_slice %215 {offsets = [0, 128], sizes = [2, 96], strides = [1, 1]} : vector<2x384xf32> to vector<2x96xf32>
    %239 = vector.extract_strided_slice %87 {offsets = [0, 0], sizes = [2, 64], strides = [1, 1]} : vector<2x96xf32> to vector<2x64xf32>
    %240 = vector.extract_strided_slice %238 {offsets = [0, 0], sizes = [2, 64], strides = [1, 1]} : vector<2x96xf32> to vector<2x64xf32>
    %241 = arith.addf %239, %240 : vector<2x64xf32>
    %242 = arith.negf %241 : vector<2x64xf32>
    %243 = math.exp %242 : vector<2x64xf32>
    %cst_93 = arith.constant 1.000000e+00 : f32
    %244 = vector.broadcast %cst_93 : f32 to vector<2x64xf32>
    %245 = arith.addf %244, %243 : vector<2x64xf32>
    %246 = arith.divf %244, %245 : vector<2x64xf32>
    %247 = vector.extract_strided_slice %87 {offsets = [0, 64], sizes = [2, 32], strides = [1, 1]} : vector<2x96xf32> to vector<2x32xf32>
    %248 = vector.extract_strided_slice %246 {offsets = [0, 0], sizes = [2, 32], strides = [1, 1]} : vector<2x64xf32> to vector<2x32xf32>
    %249 = vector.extract_strided_slice %238 {offsets = [0, 64], sizes = [2, 32], strides = [1, 1]} : vector<2x96xf32> to vector<2x32xf32>
    %250 = arith.mulf %248, %249 : vector<2x32xf32>
    %251 = arith.addf %247, %250 : vector<2x32xf32>
    %252 = math.tanh %251 : vector<2x32xf32>
    %253 = vector.extract_strided_slice %246 {offsets = [0, 32], sizes = [2, 32], strides = [1, 1]} : vector<2x64xf32> to vector<2x32xf32>
    %cst_94 = arith.constant 1.000000e+00 : f32
    %254 = vector.broadcast %cst_94 : f32 to vector<2x32xf32>
    %255 = arith.subf %254, %253 : vector<2x32xf32>
    %256 = arith.mulf %255, %252 : vector<2x32xf32>
    %257 = arith.mulf %253, %209 : vector<2x32xf32>
    %258 = arith.addf %256, %257 : vector<2x32xf32>
    %259 = tpu.concatenate %258, %237 in 1 : vector<2x32xf32>, vector<2x32xf32> -> vector<2x64xf32>
    %c0_95 = arith.constant 0 : index
    %c0_96 = arith.constant 0 : index
    %260 = vector.load %arg6[%c0_95, %c0_96] : memref<64x384xf32, #tpu.memory_space<vmem>>, vector<64x384xf32>
    %cst_97 = arith.constant dense<0.000000e+00> : vector<2x384xf32>
    %261 = tpu.matmul %259, %260, %cst_97 {dimension_numbers = #tpu.dot_dimension_numbers<[1], [0], [0], [1], [0, 0, 1, 1], [], []>} : vector<2x64xf32>, vector<64x384xf32>, vector<2x384xf32> -> vector<2x384xf32>
    %c0_98 = arith.constant 0 : index
    %c0_99 = arith.constant 0 : index
    %262 = vector.load %arg7[%c0_98, %c0_99] : memref<1x384xf32, #tpu.memory_space<vmem>>, vector<1x384xf32>
    %263 = vector.broadcast %262 : vector<1x384xf32> to vector<2x384xf32>
    %264 = arith.addf %261, %263 : vector<2x384xf32>
    %265 = vector.extract_strided_slice %264 {offsets = [0, 0], sizes = [2, 96], strides = [1, 1]} : vector<2x384xf32> to vector<2x96xf32>
    %266 = vector.extract_strided_slice %264 {offsets = [0, 256], sizes = [2, 96], strides = [1, 1]} : vector<2x384xf32> to vector<2x96xf32>
    %267 = vector.extract_strided_slice %265 {offsets = [0, 0], sizes = [2, 64], strides = [1, 1]} : vector<2x96xf32> to vector<2x64xf32>
    %268 = vector.extract_strided_slice %266 {offsets = [0, 0], sizes = [2, 64], strides = [1, 1]} : vector<2x96xf32> to vector<2x64xf32>
    %269 = arith.addf %267, %268 : vector<2x64xf32>
    %270 = arith.negf %269 : vector<2x64xf32>
    %271 = math.exp %270 : vector<2x64xf32>
    %cst_100 = arith.constant 1.000000e+00 : f32
    %272 = vector.broadcast %cst_100 : f32 to vector<2x64xf32>
    %273 = arith.addf %272, %271 : vector<2x64xf32>
    %274 = arith.divf %272, %273 : vector<2x64xf32>
    %275 = vector.extract_strided_slice %265 {offsets = [0, 64], sizes = [2, 32], strides = [1, 1]} : vector<2x96xf32> to vector<2x32xf32>
    %276 = vector.extract_strided_slice %274 {offsets = [0, 0], sizes = [2, 32], strides = [1, 1]} : vector<2x64xf32> to vector<2x32xf32>
    %277 = vector.extract_strided_slice %266 {offsets = [0, 64], sizes = [2, 32], strides = [1, 1]} : vector<2x96xf32> to vector<2x32xf32>
    %278 = arith.mulf %276, %277 : vector<2x32xf32>
    %279 = arith.addf %275, %278 : vector<2x32xf32>
    %280 = math.tanh %279 : vector<2x32xf32>
    %281 = vector.extract_strided_slice %274 {offsets = [0, 32], sizes = [2, 32], strides = [1, 1]} : vector<2x64xf32> to vector<2x32xf32>
    %cst_101 = arith.constant 1.000000e+00 : f32
    %282 = vector.broadcast %cst_101 : f32 to vector<2x32xf32>
    %283 = arith.subf %282, %281 : vector<2x32xf32>
    %284 = arith.mulf %283, %280 : vector<2x32xf32>
    %285 = arith.mulf %281, %237 : vector<2x32xf32>
    %286 = arith.addf %284, %285 : vector<2x32xf32>
    %287 = vector.extract_strided_slice %264 {offsets = [0, 128], sizes = [2, 96], strides = [1, 1]} : vector<2x384xf32> to vector<2x96xf32>
    %288 = vector.extract_strided_slice %88 {offsets = [0, 0], sizes = [2, 64], strides = [1, 1]} : vector<2x96xf32> to vector<2x64xf32>
    %289 = vector.extract_strided_slice %287 {offsets = [0, 0], sizes = [2, 64], strides = [1, 1]} : vector<2x96xf32> to vector<2x64xf32>
    %290 = arith.addf %288, %289 : vector<2x64xf32>
    %291 = arith.negf %290 : vector<2x64xf32>
    %292 = math.exp %291 : vector<2x64xf32>
    %cst_102 = arith.constant 1.000000e+00 : f32
    %293 = vector.broadcast %cst_102 : f32 to vector<2x64xf32>
    %294 = arith.addf %293, %292 : vector<2x64xf32>
    %295 = arith.divf %293, %294 : vector<2x64xf32>
    %296 = vector.extract_strided_slice %88 {offsets = [0, 64], sizes = [2, 32], strides = [1, 1]} : vector<2x96xf32> to vector<2x32xf32>
    %297 = vector.extract_strided_slice %295 {offsets = [0, 0], sizes = [2, 32], strides = [1, 1]} : vector<2x64xf32> to vector<2x32xf32>
    %298 = vector.extract_strided_slice %287 {offsets = [0, 64], sizes = [2, 32], strides = [1, 1]} : vector<2x96xf32> to vector<2x32xf32>
    %299 = arith.mulf %297, %298 : vector<2x32xf32>
    %300 = arith.addf %296, %299 : vector<2x32xf32>
    %301 = math.tanh %300 : vector<2x32xf32>
    %302 = vector.extract_strided_slice %295 {offsets = [0, 32], sizes = [2, 32], strides = [1, 1]} : vector<2x64xf32> to vector<2x32xf32>
    %cst_103 = arith.constant 1.000000e+00 : f32
    %303 = vector.broadcast %cst_103 : f32 to vector<2x32xf32>
    %304 = arith.subf %303, %302 : vector<2x32xf32>
    %305 = arith.mulf %304, %301 : vector<2x32xf32>
    %306 = arith.mulf %302, %258 : vector<2x32xf32>
    %307 = arith.addf %305, %306 : vector<2x32xf32>
    %308 = tpu.concatenate %307, %286 in 1 : vector<2x32xf32>, vector<2x32xf32> -> vector<2x64xf32>
    %c0_104 = arith.constant 0 : index
    %c0_105 = arith.constant 0 : index
    %309 = vector.load %arg6[%c0_104, %c0_105] : memref<64x384xf32, #tpu.memory_space<vmem>>, vector<64x384xf32>
    %cst_106 = arith.constant dense<0.000000e+00> : vector<2x384xf32>
    %310 = tpu.matmul %308, %309, %cst_106 {dimension_numbers = #tpu.dot_dimension_numbers<[1], [0], [0], [1], [0, 0, 1, 1], [], []>} : vector<2x64xf32>, vector<64x384xf32>, vector<2x384xf32> -> vector<2x384xf32>
    %c0_107 = arith.constant 0 : index
    %c0_108 = arith.constant 0 : index
    %311 = vector.load %arg7[%c0_107, %c0_108] : memref<1x384xf32, #tpu.memory_space<vmem>>, vector<1x384xf32>
    %312 = vector.broadcast %311 : vector<1x384xf32> to vector<2x384xf32>
    %313 = arith.addf %310, %312 : vector<2x384xf32>
    %314 = vector.extract_strided_slice %313 {offsets = [0, 0], sizes = [2, 96], strides = [1, 1]} : vector<2x384xf32> to vector<2x96xf32>
    %315 = vector.extract_strided_slice %313 {offsets = [0, 256], sizes = [2, 96], strides = [1, 1]} : vector<2x384xf32> to vector<2x96xf32>
    %316 = vector.extract_strided_slice %314 {offsets = [0, 0], sizes = [2, 64], strides = [1, 1]} : vector<2x96xf32> to vector<2x64xf32>
    %317 = vector.extract_strided_slice %315 {offsets = [0, 0], sizes = [2, 64], strides = [1, 1]} : vector<2x96xf32> to vector<2x64xf32>
    %318 = arith.addf %316, %317 : vector<2x64xf32>
    %319 = arith.negf %318 : vector<2x64xf32>
    %320 = math.exp %319 : vector<2x64xf32>
    %cst_109 = arith.constant 1.000000e+00 : f32
    %321 = vector.broadcast %cst_109 : f32 to vector<2x64xf32>
    %322 = arith.addf %321, %320 : vector<2x64xf32>
    %323 = arith.divf %321, %322 : vector<2x64xf32>
    %324 = vector.extract_strided_slice %314 {offsets = [0, 64], sizes = [2, 32], strides = [1, 1]} : vector<2x96xf32> to vector<2x32xf32>
    %325 = vector.extract_strided_slice %323 {offsets = [0, 0], sizes = [2, 32], strides = [1, 1]} : vector<2x64xf32> to vector<2x32xf32>
    %326 = vector.extract_strided_slice %315 {offsets = [0, 64], sizes = [2, 32], strides = [1, 1]} : vector<2x96xf32> to vector<2x32xf32>
    %327 = arith.mulf %325, %326 : vector<2x32xf32>
    %328 = arith.addf %324, %327 : vector<2x32xf32>
    %329 = math.tanh %328 : vector<2x32xf32>
    %330 = vector.extract_strided_slice %323 {offsets = [0, 32], sizes = [2, 32], strides = [1, 1]} : vector<2x64xf32> to vector<2x32xf32>
    %cst_110 = arith.constant 1.000000e+00 : f32
    %331 = vector.broadcast %cst_110 : f32 to vector<2x32xf32>
    %332 = arith.subf %331, %330 : vector<2x32xf32>
    %333 = arith.mulf %332, %329 : vector<2x32xf32>
    %334 = arith.mulf %330, %286 : vector<2x32xf32>
    %335 = arith.addf %333, %334 : vector<2x32xf32>
    %336 = vector.extract_strided_slice %313 {offsets = [0, 128], sizes = [2, 96], strides = [1, 1]} : vector<2x384xf32> to vector<2x96xf32>
    %337 = vector.extract_strided_slice %89 {offsets = [0, 0], sizes = [2, 64], strides = [1, 1]} : vector<2x96xf32> to vector<2x64xf32>
    %338 = vector.extract_strided_slice %336 {offsets = [0, 0], sizes = [2, 64], strides = [1, 1]} : vector<2x96xf32> to vector<2x64xf32>
    %339 = arith.addf %337, %338 : vector<2x64xf32>
    %340 = arith.negf %339 : vector<2x64xf32>
    %341 = math.exp %340 : vector<2x64xf32>
    %cst_111 = arith.constant 1.000000e+00 : f32
    %342 = vector.broadcast %cst_111 : f32 to vector<2x64xf32>
    %343 = arith.addf %342, %341 : vector<2x64xf32>
    %344 = arith.divf %342, %343 : vector<2x64xf32>
    %345 = vector.extract_strided_slice %89 {offsets = [0, 64], sizes = [2, 32], strides = [1, 1]} : vector<2x96xf32> to vector<2x32xf32>
    %346 = vector.extract_strided_slice %344 {offsets = [0, 0], sizes = [2, 32], strides = [1, 1]} : vector<2x64xf32> to vector<2x32xf32>
    %347 = vector.extract_strided_slice %336 {offsets = [0, 64], sizes = [2, 32], strides = [1, 1]} : vector<2x96xf32> to vector<2x32xf32>
    %348 = arith.mulf %346, %347 : vector<2x32xf32>
    %349 = arith.addf %345, %348 : vector<2x32xf32>
    %350 = math.tanh %349 : vector<2x32xf32>
    %351 = vector.extract_strided_slice %344 {offsets = [0, 32], sizes = [2, 32], strides = [1, 1]} : vector<2x64xf32> to vector<2x32xf32>
    %cst_112 = arith.constant 1.000000e+00 : f32
    %352 = vector.broadcast %cst_112 : f32 to vector<2x32xf32>
    %353 = arith.subf %352, %351 : vector<2x32xf32>
    %354 = arith.mulf %353, %350 : vector<2x32xf32>
    %355 = arith.mulf %351, %307 : vector<2x32xf32>
    %356 = arith.addf %354, %355 : vector<2x32xf32>
    %357 = tpu.concatenate %356, %335 in 1 : vector<2x32xf32>, vector<2x32xf32> -> vector<2x64xf32>
    %c0_113 = arith.constant 0 : index
    %c0_114 = arith.constant 0 : index
    %358 = vector.load %arg6[%c0_113, %c0_114] : memref<64x384xf32, #tpu.memory_space<vmem>>, vector<64x384xf32>
    %cst_115 = arith.constant dense<0.000000e+00> : vector<2x384xf32>
    %359 = tpu.matmul %357, %358, %cst_115 {dimension_numbers = #tpu.dot_dimension_numbers<[1], [0], [0], [1], [0, 0, 1, 1], [], []>} : vector<2x64xf32>, vector<64x384xf32>, vector<2x384xf32> -> vector<2x384xf32>
    %c0_116 = arith.constant 0 : index
    %c0_117 = arith.constant 0 : index
    %360 = vector.load %arg7[%c0_116, %c0_117] : memref<1x384xf32, #tpu.memory_space<vmem>>, vector<1x384xf32>
    %361 = vector.broadcast %360 : vector<1x384xf32> to vector<2x384xf32>
    %362 = arith.addf %359, %361 : vector<2x384xf32>
    %363 = vector.extract_strided_slice %362 {offsets = [0, 0], sizes = [2, 96], strides = [1, 1]} : vector<2x384xf32> to vector<2x96xf32>
    %364 = vector.extract_strided_slice %362 {offsets = [0, 256], sizes = [2, 96], strides = [1, 1]} : vector<2x384xf32> to vector<2x96xf32>
    %365 = vector.extract_strided_slice %363 {offsets = [0, 0], sizes = [2, 64], strides = [1, 1]} : vector<2x96xf32> to vector<2x64xf32>
    %366 = vector.extract_strided_slice %364 {offsets = [0, 0], sizes = [2, 64], strides = [1, 1]} : vector<2x96xf32> to vector<2x64xf32>
    %367 = arith.addf %365, %366 : vector<2x64xf32>
    %368 = arith.negf %367 : vector<2x64xf32>
    %369 = math.exp %368 : vector<2x64xf32>
    %cst_118 = arith.constant 1.000000e+00 : f32
    %370 = vector.broadcast %cst_118 : f32 to vector<2x64xf32>
    %371 = arith.addf %370, %369 : vector<2x64xf32>
    %372 = arith.divf %370, %371 : vector<2x64xf32>
    %373 = vector.extract_strided_slice %363 {offsets = [0, 64], sizes = [2, 32], strides = [1, 1]} : vector<2x96xf32> to vector<2x32xf32>
    %374 = vector.extract_strided_slice %372 {offsets = [0, 0], sizes = [2, 32], strides = [1, 1]} : vector<2x64xf32> to vector<2x32xf32>
    %375 = vector.extract_strided_slice %364 {offsets = [0, 64], sizes = [2, 32], strides = [1, 1]} : vector<2x96xf32> to vector<2x32xf32>
    %376 = arith.mulf %374, %375 : vector<2x32xf32>
    %377 = arith.addf %373, %376 : vector<2x32xf32>
    %378 = math.tanh %377 : vector<2x32xf32>
    %379 = vector.extract_strided_slice %372 {offsets = [0, 32], sizes = [2, 32], strides = [1, 1]} : vector<2x64xf32> to vector<2x32xf32>
    %cst_119 = arith.constant 1.000000e+00 : f32
    %380 = vector.broadcast %cst_119 : f32 to vector<2x32xf32>
    %381 = arith.subf %380, %379 : vector<2x32xf32>
    %382 = arith.mulf %381, %378 : vector<2x32xf32>
    %383 = arith.mulf %379, %335 : vector<2x32xf32>
    %384 = arith.addf %382, %383 : vector<2x32xf32>
    %385 = vector.extract_strided_slice %362 {offsets = [0, 128], sizes = [2, 96], strides = [1, 1]} : vector<2x384xf32> to vector<2x96xf32>
    %386 = vector.extract_strided_slice %90 {offsets = [0, 0], sizes = [2, 64], strides = [1, 1]} : vector<2x96xf32> to vector<2x64xf32>
    %387 = vector.extract_strided_slice %385 {offsets = [0, 0], sizes = [2, 64], strides = [1, 1]} : vector<2x96xf32> to vector<2x64xf32>
    %388 = arith.addf %386, %387 : vector<2x64xf32>
    %389 = arith.negf %388 : vector<2x64xf32>
    %390 = math.exp %389 : vector<2x64xf32>
    %cst_120 = arith.constant 1.000000e+00 : f32
    %391 = vector.broadcast %cst_120 : f32 to vector<2x64xf32>
    %392 = arith.addf %391, %390 : vector<2x64xf32>
    %393 = arith.divf %391, %392 : vector<2x64xf32>
    %394 = vector.extract_strided_slice %90 {offsets = [0, 64], sizes = [2, 32], strides = [1, 1]} : vector<2x96xf32> to vector<2x32xf32>
    %395 = vector.extract_strided_slice %393 {offsets = [0, 0], sizes = [2, 32], strides = [1, 1]} : vector<2x64xf32> to vector<2x32xf32>
    %396 = vector.extract_strided_slice %385 {offsets = [0, 64], sizes = [2, 32], strides = [1, 1]} : vector<2x96xf32> to vector<2x32xf32>
    %397 = arith.mulf %395, %396 : vector<2x32xf32>
    %398 = arith.addf %394, %397 : vector<2x32xf32>
    %399 = math.tanh %398 : vector<2x32xf32>
    %400 = vector.extract_strided_slice %393 {offsets = [0, 32], sizes = [2, 32], strides = [1, 1]} : vector<2x64xf32> to vector<2x32xf32>
    %cst_121 = arith.constant 1.000000e+00 : f32
    %401 = vector.broadcast %cst_121 : f32 to vector<2x32xf32>
    %402 = arith.subf %401, %400 : vector<2x32xf32>
    %403 = arith.mulf %402, %399 : vector<2x32xf32>
    %404 = arith.mulf %400, %356 : vector<2x32xf32>
    %405 = arith.addf %403, %404 : vector<2x32xf32>
    %406 = tpu.concatenate %405, %384 in 1 : vector<2x32xf32>, vector<2x32xf32> -> vector<2x64xf32>
    %c0_122 = arith.constant 0 : index
    %c0_123 = arith.constant 0 : index
    %407 = vector.load %arg6[%c0_122, %c0_123] : memref<64x384xf32, #tpu.memory_space<vmem>>, vector<64x384xf32>
    %cst_124 = arith.constant dense<0.000000e+00> : vector<2x384xf32>
    %408 = tpu.matmul %406, %407, %cst_124 {dimension_numbers = #tpu.dot_dimension_numbers<[1], [0], [0], [1], [0, 0, 1, 1], [], []>} : vector<2x64xf32>, vector<64x384xf32>, vector<2x384xf32> -> vector<2x384xf32>
    %c0_125 = arith.constant 0 : index
    %c0_126 = arith.constant 0 : index
    %409 = vector.load %arg7[%c0_125, %c0_126] : memref<1x384xf32, #tpu.memory_space<vmem>>, vector<1x384xf32>
    %410 = vector.broadcast %409 : vector<1x384xf32> to vector<2x384xf32>
    %411 = arith.addf %408, %410 : vector<2x384xf32>
    %412 = vector.extract_strided_slice %411 {offsets = [0, 0], sizes = [2, 96], strides = [1, 1]} : vector<2x384xf32> to vector<2x96xf32>
    %413 = vector.extract_strided_slice %411 {offsets = [0, 256], sizes = [2, 96], strides = [1, 1]} : vector<2x384xf32> to vector<2x96xf32>
    %414 = vector.extract_strided_slice %412 {offsets = [0, 0], sizes = [2, 64], strides = [1, 1]} : vector<2x96xf32> to vector<2x64xf32>
    %415 = vector.extract_strided_slice %413 {offsets = [0, 0], sizes = [2, 64], strides = [1, 1]} : vector<2x96xf32> to vector<2x64xf32>
    %416 = arith.addf %414, %415 : vector<2x64xf32>
    %417 = arith.negf %416 : vector<2x64xf32>
    %418 = math.exp %417 : vector<2x64xf32>
    %cst_127 = arith.constant 1.000000e+00 : f32
    %419 = vector.broadcast %cst_127 : f32 to vector<2x64xf32>
    %420 = arith.addf %419, %418 : vector<2x64xf32>
    %421 = arith.divf %419, %420 : vector<2x64xf32>
    %422 = vector.extract_strided_slice %412 {offsets = [0, 64], sizes = [2, 32], strides = [1, 1]} : vector<2x96xf32> to vector<2x32xf32>
    %423 = vector.extract_strided_slice %421 {offsets = [0, 0], sizes = [2, 32], strides = [1, 1]} : vector<2x64xf32> to vector<2x32xf32>
    %424 = vector.extract_strided_slice %413 {offsets = [0, 64], sizes = [2, 32], strides = [1, 1]} : vector<2x96xf32> to vector<2x32xf32>
    %425 = arith.mulf %423, %424 : vector<2x32xf32>
    %426 = arith.addf %422, %425 : vector<2x32xf32>
    %427 = math.tanh %426 : vector<2x32xf32>
    %428 = vector.extract_strided_slice %421 {offsets = [0, 32], sizes = [2, 32], strides = [1, 1]} : vector<2x64xf32> to vector<2x32xf32>
    %cst_128 = arith.constant 1.000000e+00 : f32
    %429 = vector.broadcast %cst_128 : f32 to vector<2x32xf32>
    %430 = arith.subf %429, %428 : vector<2x32xf32>
    %431 = arith.mulf %430, %427 : vector<2x32xf32>
    %432 = arith.mulf %428, %384 : vector<2x32xf32>
    %433 = arith.addf %431, %432 : vector<2x32xf32>
    %434 = vector.extract_strided_slice %411 {offsets = [0, 128], sizes = [2, 96], strides = [1, 1]} : vector<2x384xf32> to vector<2x96xf32>
    %435 = vector.extract_strided_slice %91 {offsets = [0, 0], sizes = [2, 64], strides = [1, 1]} : vector<2x96xf32> to vector<2x64xf32>
    %436 = vector.extract_strided_slice %434 {offsets = [0, 0], sizes = [2, 64], strides = [1, 1]} : vector<2x96xf32> to vector<2x64xf32>
    %437 = arith.addf %435, %436 : vector<2x64xf32>
    %438 = arith.negf %437 : vector<2x64xf32>
    %439 = math.exp %438 : vector<2x64xf32>
    %cst_129 = arith.constant 1.000000e+00 : f32
    %440 = vector.broadcast %cst_129 : f32 to vector<2x64xf32>
    %441 = arith.addf %440, %439 : vector<2x64xf32>
    %442 = arith.divf %440, %441 : vector<2x64xf32>
    %443 = vector.extract_strided_slice %91 {offsets = [0, 64], sizes = [2, 32], strides = [1, 1]} : vector<2x96xf32> to vector<2x32xf32>
    %444 = vector.extract_strided_slice %442 {offsets = [0, 0], sizes = [2, 32], strides = [1, 1]} : vector<2x64xf32> to vector<2x32xf32>
    %445 = vector.extract_strided_slice %434 {offsets = [0, 64], sizes = [2, 32], strides = [1, 1]} : vector<2x96xf32> to vector<2x32xf32>
    %446 = arith.mulf %444, %445 : vector<2x32xf32>
    %447 = arith.addf %443, %446 : vector<2x32xf32>
    %448 = math.tanh %447 : vector<2x32xf32>
    %449 = vector.extract_strided_slice %442 {offsets = [0, 32], sizes = [2, 32], strides = [1, 1]} : vector<2x64xf32> to vector<2x32xf32>
    %cst_130 = arith.constant 1.000000e+00 : f32
    %450 = vector.broadcast %cst_130 : f32 to vector<2x32xf32>
    %451 = arith.subf %450, %449 : vector<2x32xf32>
    %452 = arith.mulf %451, %448 : vector<2x32xf32>
    %453 = arith.mulf %449, %405 : vector<2x32xf32>
    %454 = arith.addf %452, %453 : vector<2x32xf32>
    %455 = tpu.concatenate %454, %433 in 1 : vector<2x32xf32>, vector<2x32xf32> -> vector<2x64xf32>
    %c0_131 = arith.constant 0 : index
    %c0_132 = arith.constant 0 : index
    %456 = vector.load %arg6[%c0_131, %c0_132] : memref<64x384xf32, #tpu.memory_space<vmem>>, vector<64x384xf32>
    %cst_133 = arith.constant dense<0.000000e+00> : vector<2x384xf32>
    %457 = tpu.matmul %455, %456, %cst_133 {dimension_numbers = #tpu.dot_dimension_numbers<[1], [0], [0], [1], [0, 0, 1, 1], [], []>} : vector<2x64xf32>, vector<64x384xf32>, vector<2x384xf32> -> vector<2x384xf32>
    %c0_134 = arith.constant 0 : index
    %c0_135 = arith.constant 0 : index
    %458 = vector.load %arg7[%c0_134, %c0_135] : memref<1x384xf32, #tpu.memory_space<vmem>>, vector<1x384xf32>
    %459 = vector.broadcast %458 : vector<1x384xf32> to vector<2x384xf32>
    %460 = arith.addf %457, %459 : vector<2x384xf32>
    %461 = vector.extract_strided_slice %460 {offsets = [0, 0], sizes = [2, 96], strides = [1, 1]} : vector<2x384xf32> to vector<2x96xf32>
    %462 = vector.extract_strided_slice %460 {offsets = [0, 256], sizes = [2, 96], strides = [1, 1]} : vector<2x384xf32> to vector<2x96xf32>
    %463 = vector.extract_strided_slice %461 {offsets = [0, 0], sizes = [2, 64], strides = [1, 1]} : vector<2x96xf32> to vector<2x64xf32>
    %464 = vector.extract_strided_slice %462 {offsets = [0, 0], sizes = [2, 64], strides = [1, 1]} : vector<2x96xf32> to vector<2x64xf32>
    %465 = arith.addf %463, %464 : vector<2x64xf32>
    %466 = arith.negf %465 : vector<2x64xf32>
    %467 = math.exp %466 : vector<2x64xf32>
    %cst_136 = arith.constant 1.000000e+00 : f32
    %468 = vector.broadcast %cst_136 : f32 to vector<2x64xf32>
    %469 = arith.addf %468, %467 : vector<2x64xf32>
    %470 = arith.divf %468, %469 : vector<2x64xf32>
    %471 = vector.extract_strided_slice %461 {offsets = [0, 64], sizes = [2, 32], strides = [1, 1]} : vector<2x96xf32> to vector<2x32xf32>
    %472 = vector.extract_strided_slice %470 {offsets = [0, 0], sizes = [2, 32], strides = [1, 1]} : vector<2x64xf32> to vector<2x32xf32>
    %473 = vector.extract_strided_slice %462 {offsets = [0, 64], sizes = [2, 32], strides = [1, 1]} : vector<2x96xf32> to vector<2x32xf32>
    %474 = arith.mulf %472, %473 : vector<2x32xf32>
    %475 = arith.addf %471, %474 : vector<2x32xf32>
    %476 = math.tanh %475 : vector<2x32xf32>
    %477 = vector.extract_strided_slice %470 {offsets = [0, 32], sizes = [2, 32], strides = [1, 1]} : vector<2x64xf32> to vector<2x32xf32>
    %cst_137 = arith.constant 1.000000e+00 : f32
    %478 = vector.broadcast %cst_137 : f32 to vector<2x32xf32>
    %479 = arith.subf %478, %477 : vector<2x32xf32>
    %480 = arith.mulf %479, %476 : vector<2x32xf32>
    %481 = arith.mulf %477, %433 : vector<2x32xf32>
    %482 = arith.addf %480, %481 : vector<2x32xf32>
    %483 = tpu.concatenate %139, %188, %237, %286, %335, %384, %433, %482 in 0 : vector<2x32xf32>, vector<2x32xf32>, vector<2x32xf32>, vector<2x32xf32>, vector<2x32xf32>, vector<2x32xf32>, vector<2x32xf32>, vector<2x32xf32> -> vector<16x32xf32>
    %c0_138 = arith.constant 0 : index
    %c0_139 = arith.constant 0 : index
    %484 = vector.load %arg8[%c0_138, %c0_139] : memref<32x256xf32, #tpu.memory_space<vmem>>, vector<32x256xf32>
    %cst_140 = arith.constant dense<0.000000e+00> : vector<16x256xf32>
    %485 = tpu.matmul %483, %484, %cst_140 {dimension_numbers = #tpu.dot_dimension_numbers<[1], [0], [0], [1], [0, 0, 1, 1], [], []>} : vector<16x32xf32>, vector<32x256xf32>, vector<16x256xf32> -> vector<16x256xf32>
    %c0_141 = arith.constant 0 : index
    %c0_142 = arith.constant 0 : index
    %486 = vector.load %arg9[%c0_141, %c0_142] : memref<1x256xf32, #tpu.memory_space<vmem>>, vector<1x256xf32>
    %487 = vector.broadcast %486 : vector<1x256xf32> to vector<16x256xf32>
    %488 = arith.addf %485, %487 : vector<16x256xf32>
    %c0_143 = arith.constant 0 : index
    %c0_144 = arith.constant 0 : index
    %489 = vector.load %arg10[%c0_143, %c0_144] : memref<16x256xf32, #tpu.memory_space<vmem>>, vector<16x256xf32>
    tpu.vector_store %arg10[%c0_143, %c0_144], %488 {strides = array<i32>} : memref<16x256xf32, #tpu.memory_space<vmem>>, vector<16x256xf32>,
    %c0_145 = arith.constant 0 : index
    %c0_146 = arith.constant 0 : index
    %c0_147 = arith.constant 0 : index
    %490 = vector.load %arg11[%c0_145, %c0_146, %c0_147] : memref<2x2x32xf32, #tpu.memory_space<vmem>>, vector<1x2x32xf32>
    %491 = vector.shape_cast %490 : vector<1x2x32xf32> to vector<2x32xf32>
    %492 = vector.shape_cast %454 : vector<2x32xf32> to vector<1x2x32xf32>
    tpu.vector_store %arg11[%c0_145, %c0_146, %c0_147], %492 {strides = array<i32>} : memref<2x2x32xf32, #tpu.memory_space<vmem>>, vector<1x2x32xf32>,
    %c1_148 = arith.constant 1 : index
    %c0_149 = arith.constant 0 : index
    %c0_150 = arith.constant 0 : index
    %493 = vector.load %arg11[%c1_148, %c0_149, %c0_150] : memref<2x2x32xf32, #tpu.memory_space<vmem>>, vector<1x2x32xf32>
    %494 = vector.shape_cast %493 : vector<1x2x32xf32> to vector<2x32xf32>
    %495 = vector.shape_cast %482 : vector<2x32xf32> to vector<1x2x32xf32>
    tpu.vector_store %arg11[%c1_148, %c0_149, %c0_150], %495 {strides = array<i32>} : memref<2x2x32xf32, #tpu.memory_space<vmem>>, vector<1x2x32xf32>,
    return
  }
  func.func @transform_0(%arg0: i32, %arg1: memref<2x8xi32, #tpu.memory_space<smem>>) -> (i32, i32, i32) {
    %c0_i32 = arith.constant 0 : i32
    %c0_i32_0 = arith.constant 0 : i32
    %c0_i32_1 = arith.constant 0 : i32
    %c0_i32_2 = arith.constant 0 : i32
    return %c0_i32, %c0_i32_0, %c0_i32_1 : i32, i32, i32
  }
  func.func @transform_1(%arg0: i32, %arg1: memref<2x8xi32, #tpu.memory_space<smem>>) -> (i32, i32, i32) {
    %c0_i32 = arith.constant 0 : i32
    %c0_i32_0 = arith.constant 0 : i32
    %c0_i32_1 = arith.constant 0 : i32
    %c0_i32_2 = arith.constant 0 : i32
    return %c0_i32, %c0_i32_0, %c0_i32_1 : i32, i32, i32
  }
  func.func @transform_2(%arg0: i32, %arg1: memref<2x8xi32, #tpu.memory_space<smem>>) -> (i32, i32) {
    %c0_i32 = arith.constant 0 : i32
    %c0_i32_0 = arith.constant 0 : i32
    %c0_i32_1 = arith.constant 0 : i32
    return %c0_i32, %c0_i32_0 : i32, i32
  }
  func.func @transform_3(%arg0: i32, %arg1: memref<2x8xi32, #tpu.memory_space<smem>>) -> (i32, i32) {
    %c0_i32 = arith.constant 0 : i32
    %c0_i32_0 = arith.constant 0 : i32
    %c0_i32_1 = arith.constant 0 : i32
    return %c0_i32, %c0_i32_0 : i32, i32
  }
  func.func @transform_4(%arg0: i32, %arg1: memref<2x8xi32, #tpu.memory_space<smem>>) -> (i32, i32) {
    %c0_i32 = arith.constant 0 : i32
    %c0_i32_0 = arith.constant 0 : i32
    %c0_i32_1 = arith.constant 0 : i32
    return %c0_i32, %c0_i32_0 : i32, i32
  }
  func.func @transform_5(%arg0: i32, %arg1: memref<2x8xi32, #tpu.memory_space<smem>>) -> (i32, i32) {
    %c0_i32 = arith.constant 0 : i32
    %c0_i32_0 = arith.constant 0 : i32
    %c0_i32_1 = arith.constant 0 : i32
    return %c0_i32, %c0_i32_0 : i32, i32
  }
  func.func @transform_6(%arg0: i32, %arg1: memref<2x8xi32, #tpu.memory_space<smem>>) -> (i32, i32) {
    %c0_i32 = arith.constant 0 : i32
    %c0_i32_0 = arith.constant 0 : i32
    %c0_i32_1 = arith.constant 0 : i32
    return %c0_i32, %c0_i32_0 : i32, i32
  }
  func.func @transform_7(%arg0: i32, %arg1: memref<2x8xi32, #tpu.memory_space<smem>>) -> (i32, i32) {
    %c0_i32 = arith.constant 0 : i32
    %c0_i32_0 = arith.constant 0 : i32
    %c0_i32_1 = arith.constant 0 : i32
    return %c0_i32, %c0_i32_0 : i32, i32
  }
  func.func @transform_8(%arg0: i32, %arg1: memref<2x8xi32, #tpu.memory_space<smem>>) -> (i32, i32) {
    %c0_i32 = arith.constant 0 : i32
    %c0_i32_0 = arith.constant 0 : i32
    %c0_i32_1 = arith.constant 0 : i32
    return %c0_i32, %c0_i32_0 : i32, i32
  }
  func.func @transform_9(%arg0: i32, %arg1: memref<2x8xi32, #tpu.memory_space<smem>>) -> (i32, i32, i32) {
    %c0_i32 = arith.constant 0 : i32
    %c0_i32_0 = arith.constant 0 : i32
    %c0_i32_1 = arith.constant 0 : i32
    %c0_i32_2 = arith.constant 0 : i32
    return %c0_i32, %c0_i32_0, %c0_i32_1 : i32, i32, i32
  }
}

</mosaic_0001>

<llo_original>
// kernel: seq2seq_decoder_forward.1
$region0: #{seq2seq_decoder_forward.1}
  #allocation0 [shape = 'u32[]', space=smem, size = 0x4, offset = 0x4, fixed_abs, tag = 'smem constant byte address 0x4 - core index']
  #allocation1 [shape = 'u32[144,128]{1,0:T(1,128)}', space=vmem, size = 0x12000, scoped, tag = 'internal scratch']
  #allocation2 [shape = 's32[1]{0}', space=sflag, size = 0x4, scoped, tag = 'scoped memory for seq2seq_decoder_forward.1']
  #allocation3 [shape = 'u8[1024]{0}', space=smem, size = 0x400, scoped, tag = 'prefetched SMEM operand 0']
  %s0 = inlined_call_operand.vmem [shape: s32[2,8], index: 0, kind: input, shape index: {}]
  %s1 = inlined_call_operand.vmem [shape: f32[256,1,96], index: 1, kind: input, shape index: {}]
  %s2 = inlined_call_operand.vmem [shape: f32[2,2,32], index: 2, kind: input, shape index: {}]
  %s3 = inlined_call_operand.vmem [shape: f32[64,256], index: 3, kind: input, shape index: {}]
  %s4 = inlined_call_operand.vmem [shape: f32[1,256], index: 4, kind: input, shape index: {}]
  %s5 = inlined_call_operand.vmem [shape: f32[64,384], index: 5, kind: input, shape index: {}]
  %s6 = inlined_call_operand.vmem [shape: f32[1,384], index: 6, kind: input, shape index: {}]
  %s7 = inlined_call_operand.vmem [shape: f32[32,256], index: 7, kind: input, shape index: {}]
  %s8 = inlined_call_operand.vmem [shape: f32[1,256], index: 8, kind: input, shape index: {}]
  %s9 = inlined_call_operand.vmem [shape: f32[16,256], index: 9, kind: output, shape index: {0}]
  %s10 = inlined_call_operand.hbm [shape: f32[2,2,32], index: 10, kind: output, shape index: {1}]
  %11 = xla_tuple %s9, %s10
  %s12 = sld [smem:[#allocation0]]
  $region50: #{seq2seq_decoder_forward.1} parent=0
    _
  %s14 = ssub.s32 1, %s12
  %s15 = scalar_select 0, %s14, %s12
  %s16 = sshll.u32 %s0, 4
  %s17 = int_to_ptr.vmem [resolvable:$true] %s16
  %19 = dma.vmem_to_smem %s17, 32, [#allocation3], [#allocation2]
  %20 = dma.done [#allocation2], 32
  %21 = sfence
  $region1: #{seq2seq_decoder_forward.1} parent=0
    #allocation4 [shape = 'u8[2048]{0}', space=vmem, size = 0x800, scoped, tag = 'output window, operand 1, single buffered']
    #allocation5 [shape = 's32[1]{0}', space=sflag, size = 0x4, scoped, tag = 'scoped memory for seq2seq_decoder_forward.1']
    %22 = vsyncpa [#allocation5], 0
    // Predicated region
    $region2: #{seq2seq_decoder_forward.1} parent=1 // pred_check
      _
    $region3: #{seq2seq_decoder_forward.1} parent=1 // pred_check_branch
      %24 = sbr.rel (0) target = $region5
    $region4: #{seq2seq_decoder_forward.1} parent=1 // pred_region
      _
    $region5: #{seq2seq_decoder_forward.1} parent=1 // pred_fallthru
      _
    // Predicated region
    $region6: #{seq2seq_decoder_forward.1} parent=1 // pred_check
      _
    $region7: #{seq2seq_decoder_forward.1} parent=1 // pred_check_branch
      %26 = sbr.rel (0) target = $region9
    $region8: #{seq2seq_decoder_forward.1} parent=1 // pred_region
      _
    $region9: #{seq2seq_decoder_forward.1} parent=1 // pred_fallthru
      _
    // Predicated region
    $region10: #{seq2seq_decoder_forward.1} parent=1 // pred_check
      _
    $region11: #{seq2seq_decoder_forward.1} parent=1 // pred_check_branch
      %28 = sbr.rel (0) target = $region13
    $region12: #{seq2seq_decoder_forward.1} parent=1 // pred_region
      _
    $region13: #{seq2seq_decoder_forward.1} parent=1 // pred_fallthru
      _
    // Predicated region
    $region14: #{seq2seq_decoder_forward.1} parent=1 // pred_check
      _
    $region15: #{seq2seq_decoder_forward.1} parent=1 // pred_check_branch
      %30 = sbr.rel (0) target = $region17
    $region16: #{seq2seq_decoder_forward.1} parent=1 // pred_region
      _
    $region17: #{seq2seq_decoder_forward.1} parent=1 // pred_fallthru
      _
    // Predicated region
    $region18: #{seq2seq_decoder_forward.1} parent=1 // pred_check
      _
    $region19: #{seq2seq_decoder_forward.1} parent=1 // pred_check_branch
      %32 = sbr.rel (0) target = $region21
    $region20: #{seq2seq_decoder_forward.1} parent=1 // pred_region
      _
    $region21: #{seq2seq_decoder_forward.1} parent=1 // pred_fallthru
      _
    // Predicated region
    $region22: #{seq2seq_decoder_forward.1} parent=1 // pred_check
      _
    $region23: #{seq2seq_decoder_forward.1} parent=1 // pred_check_branch
      %34 = sbr.rel (0) target = $region25
    $region24: #{seq2seq_decoder_forward.1} parent=1 // pred_region
      _
    $region25: #{seq2seq_decoder_forward.1} parent=1 // pred_fallthru
      _
    // Predicated region
    $region26: #{seq2seq_decoder_forward.1} parent=1 // pred_check
      _
    $region27: #{seq2seq_decoder_forward.1} parent=1 // pred_check_branch
      %36 = sbr.rel (0) target = $region29
    $region28: #{seq2seq_decoder_forward.1} parent=1 // pred_region
      _
    $region29: #{seq2seq_decoder_forward.1} parent=1 // pred_fallthru
      _
    // Predicated region
    $region30: #{seq2seq_decoder_forward.1} parent=1 // pred_check
      _
    $region31: #{seq2seq_decoder_forward.1} parent=1 // pred_check_branch
      %38 = sbr.rel (0) target = $region33
    $region32: #{seq2seq_decoder_forward.1} parent=1 // pred_region
      _
    $region33: #{seq2seq_decoder_forward.1} parent=1 // pred_fallthru
      _
    %s39 = sld [smem:[#allocation3]]
    %s40 = scalar_lea.vmem %s1, %s39
    %v41 = vld [vmem:[%s40] sm:$0x1]
    %s42 = sld [smem:[#allocation3 + $0x80]]
    %s43 = scalar_lea.vmem %s1, %s42
    %v44 = vld [vmem:[%s43] sm:$0x1]
    %v46 = vlaneseq
    %v47 = vshrl.u32 %v46, 7
    %v48 = vsub.s32 0, %v47
    %v49 = vrot.slane %v44, %v48
    %vm51 = vcmask 1040384
    %v52 = vsel %vm51, %v41, %v49
    %s53 = sld [smem:[#allocation3 + $0x1]]
    %s54 = scalar_lea.vmem %s1, %s53
    %v55 = vld [vmem:[%s54] sm:$0x1]
    %s56 = sld [smem:[#allocation3 + $0x81]]
    %s57 = scalar_lea.vmem %s1, %s56
    %v58 = vld [vmem:[%s57] sm:$0x1]
    %v60 = vlaneseq
    %v61 = vshrl.u32 %v60, 7
    %v62 = vsub.s32 0, %v61
    %v63 = vrot.slane %v58, %v62
    %v65 = vsel %vm51, %v55, %v63
    %s66 = sld [smem:[#allocation3 + $0x2]]
    %s67 = scalar_lea.vmem %s1, %s66
    %v68 = vld [vmem:[%s67] sm:$0x1]
    %s69 = sld [smem:[#allocation3 + $0x82]]
    %s70 = scalar_lea.vmem %s1, %s69
    %v71 = vld [vmem:[%s70] sm:$0x1]
    %v73 = vlaneseq
    %v74 = vshrl.u32 %v73, 7
    %v75 = vsub.s32 0, %v74
    %v76 = vrot.slane %v71, %v75
    %v78 = vsel %vm51, %v68, %v76
    %s79 = sld [smem:[#allocation3 + $0x3]]
    %s80 = scalar_lea.vmem %s1, %s79
    %v81 = vld [vmem:[%s80] sm:$0x1]
    %s82 = sld [smem:[#allocation3 + $0x83]]
    %s83 = scalar_lea.vmem %s1, %s82
    %v84 = vld [vmem:[%s83] sm:$0x1]
    %v86 = vlaneseq
    %v87 = vshrl.u32 %v86, 7
    %v88 = vsub.s32 0, %v87
    %v89 = vrot.slane %v84, %v88
    %v91 = vsel %vm51, %v81, %v89
    %s92 = sld [smem:[#allocation3 + $0x4]]
    %s93 = scalar_lea.vmem %s1, %s92
    %v94 = vld [vmem:[%s93] sm:$0x1]
    %s95 = sld [smem:[#allocation3 + $0x84]]
    %s96 = scalar_lea.vmem %s1, %s95
    %v97 = vld [vmem:[%s96] sm:$0x1]
    %v99 = vlaneseq
    %v100 = vshrl.u32 %v99, 7
    %v101 = vsub.s32 0, %v100
    %v102 = vrot.slane %v97, %v101
    %v104 = vsel %vm51, %v94, %v102
    %s105 = sld [smem:[#allocation3 + $0x5]]
    %s106 = scalar_lea.vmem %s1, %s105
    %v107 = vld [vmem:[%s106] sm:$0x1]
    %s108 = sld [smem:[#allocation3 + $0x85]]
    %s109 = scalar_lea.vmem %s1, %s108
    %v110 = vld [vmem:[%s109] sm:$0x1]
    %v112 = vlaneseq
    %v113 = vshrl.u32 %v112, 7
    %v114 = vsub.s32 0, %v113
    %v115 = vrot.slane %v110, %v114
    %v117 = vsel %vm51, %v107, %v115
    %s118 = sld [smem:[#allocation3 + $0x6]]
    %s119 = scalar_lea.vmem %s1, %s118
    %v120 = vld [vmem:[%s119] sm:$0x1]
    %s121 = sld [smem:[#allocation3 + $0x86]]
    %s122 = scalar_lea.vmem %s1, %s121
    %v123 = vld [vmem:[%s122] sm:$0x1]
    %v125 = vlaneseq
    %v126 = vshrl.u32 %v125, 7
    %v127 = vsub.s32 0, %v126
    %v128 = vrot.slane %v123, %v127
    %v130 = vsel %vm51, %v120, %v128
    %s131 = sld [smem:[#allocation3 + $0x7]]
    %s132 = scalar_lea.vmem %s1, %s131
    %v133 = vld [vmem:[%s132] sm:$0x1]
    %s134 = sld [smem:[#allocation3 + $0x87]]
    %s135 = scalar_lea.vmem %s1, %s134
    %v136 = vld [vmem:[%s135] sm:$0x1]
    %v138 = vlaneseq
    %v139 = vshrl.u32 %v138, 7
    %v140 = vsub.s32 0, %v139
    %v141 = vrot.slane %v136, %v140
    %v143 = vsel %vm51, %v133, %v141
    %v144 = vld [vmem:[%s2] sm:$0x3]
    %s145 = scalar_lea.vmem %s2, 2
    %v146 = vld [vmem:[%s145] sm:$0x3]
    %148 = vrot.lane.b32.xlu0 %v144, 32
    %v149 = vpop.permute.xlu0 %148
    %vm151 = vcmask 261120
    %v152 = vsel %vm151, %v146, %v149
    %v153 = vld [vmem:[%s3] sm:$0xff]
    %v154 = vld [vmem:[%s3 + $0x8] sm:$0xff]
    %v155 = vld [vmem:[%s3 + $0x10] sm:$0xff]
    %v156 = vld [vmem:[%s3 + $0x18] sm:$0xff]
    %v157 = vld [vmem:[%s3 + $0x20] sm:$0xff]
    %v158 = vld [vmem:[%s3 + $0x28] sm:$0xff]
    %v159 = vld [vmem:[%s3 + $0x30] sm:$0xff]
    %v160 = vld [vmem:[%s3 + $0x38] sm:$0xff]
    %v161 = vld [vmem:[%s3 + $0x40] sm:$0xff]
    %v162 = vld [vmem:[%s3 + $0x48] sm:$0xff]
    %v163 = vld [vmem:[%s3 + $0x50] sm:$0xff]
    %v164 = vld [vmem:[%s3 + $0x58] sm:$0xff]
    %v165 = vld [vmem:[%s3 + $0x60] sm:$0xff]
    %v166 = vld [vmem:[%s3 + $0x68] sm:$0xff]
    %v167 = vld [vmem:[%s3 + $0x70] sm:$0xff]
    %v168 = vld [vmem:[%s3 + $0x78] sm:$0xff]
    %v169 = vld [vmem:[%s4] sm:$0x3]
    %v171 = vlaneseq
    %v172 = vshrl.u32 %v171, 7
    %v173 = vsub.s32 0, %v172
    %v174 = vrot.slane %v169, %v173
    %v175 = vlaneseq
    %v176 = vshrl.u32 %v175, 7
    %v177 = vsub.s32 1, %v176
    %v178 = vrot.slane %v169, %v177
    %vm181 = vcmask 523264
    %v183 = vsel %vm181, %v152, 0
    %185 = vmatprep.subr.mxu0 %v154
    %186 = vmatpush1.msra.mxu0 %v153
    %187 = vmatprep.subr.mxu0 %v156
    %188 = vmatpush1.msra.mxu0 %v155
    %189 = vmatprep.subr.mxu0 %v158
    %190 = vmatpush1.msra.mxu0 %v157
    %191 = vmatprep.subr.mxu0 %v160
    %192 = vmatpush1.msra.mxu0 %v159
    %193 = vmatprep.subr.mxu0 %v162
    %194 = vmatpush1.msra.mxu0 %v161
    %195 = vmatprep.subr.mxu0 %v164
    %196 = vmatpush1.msra.mxu0 %v163
    %197 = vmatprep.subr.mxu0 %v166
    %198 = vmatpush1.msra.mxu0 %v165
    %199 = vmatprep.subr.mxu0 %v168
    %200 = vmatpush1.msra.mxu0 %v167
    %201 = vmatprep.subr.mxu0 0.0
    %202 = vmatpush1.msra.mxu0 0.0
    %203 = vmatprep.subr.mxu0 0.0
    %204 = vmatpush1.msra.mxu0 0.0
    %205 = vmatprep.subr.mxu0 0.0
    %206 = vmatpush1.msra.mxu0 0.0
    %207 = vmatprep.subr.mxu0 0.0
    %208 = vmatpush1.msra.mxu0 0.0
    %209 = vmatprep.subr.mxu0 0.0
    %210 = vmatpush1.msra.mxu0 0.0
    %211 = vmatprep.subr.mxu0 0.0
    %212 = vmatpush1.msra.mxu0 0.0
    %213 = vmatprep.subr.mxu0 0.0
    %214 = vmatpush1.msra.mxu0 0.0
    %215 = vmatprep.subr.mxu0 0.0
    %216 = vmatpush1.msra.mxu0 0.0
    %217 = vmatprep.subr.mxu0 0.0
    %218 = vmatpush1.msra.mxu0 0.0
    %219 = vmatprep.subr.mxu0 0.0
    %220 = vmatpush1.msra.mxu0 0.0
    %221 = vmatprep.subr.mxu0 0.0
    %222 = vmatpush1.msra.mxu0 0.0
    %223 = vmatprep.subr.mxu0 0.0
    %224 = vmatpush1.msra.mxu0 0.0
    %225 = vmatprep.subr.mxu0 0.0
    %226 = vmatpush1.msra.mxu0 0.0
    %227 = vmatprep.subr.mxu0 0.0
    %228 = vmatpush1.msra.mxu0 0.0
    %229 = vmatprep.subr.mxu0 0.0
    %230 = vmatpush1.msra.mxu0 0.0
    %231 = vmatprep.subr.mxu0 0.0
    %232 = vmatpush1.msra.mxu0 0.0
    %233 = vmatprep.subr.mxu0 0.0
    %234 = vmatpush1.msra.mxu0 0.0
    %235 = vmatprep.subr.mxu0 0.0
    %236 = vmatpush1.msra.mxu0 0.0
    %237 = vmatprep.subr.mxu0 0.0
    %238 = vmatpush1.msra.mxu0 0.0
    %239 = vmatprep.subr.mxu0 0.0
    %240 = vmatpush1.msra.mxu0 0.0
    %241 = vmatprep.subr.mxu0 0.0
    %242 = vmatpush1.msra.mxu0 0.0
    %243 = vmatprep.subr.mxu0 0.0
    %244 = vmatpush1.msra.mxu0 0.0
    %245 = vmatprep.subr.mxu0 0.0
    %246 = vmatpush1.msra.mxu0 0.0
    %247 = vmatprep.subr.mxu0 0.0
    %248 = vmatpush1.msra.mxu0 0.0
    %249 = vmatprep.mubr.f32.mxu0 0.0
    %250 = vmatmul.mubr.f32.gmra.mrb[0].mxu0 %v183
    %v251 = vpop.f32.mrb[0].mxu0
    %v252 = vadd.f32 %v174, %v251
    %v253 = vpop.f32.mrb[0].mxu0
    %v254 = vadd.f32 %v178, %v253
    %255 = vdwg.mxu0
    %v256 = vadd.f32 %v52, %v252
    %v257 = vadd.f32 %v65, %v252
    %v258 = vadd.f32 %v78, %v252
    %v259 = vadd.f32 %v91, %v252
    %v260 = vadd.f32 %v104, %v252
    %v261 = vadd.f32 %v117, %v252
    %v262 = vadd.f32 %v130, %v252
    %v263 = vadd.f32 %v143, %v252
    %v264 = vadd.f32 %v256, %v254
    %v265 = vxor.u32 %v264, 2147483648
    %v266 = vmul.f32 %v265, 1.442695
    %v267 = vpow.pop %v266
    %v268 = vadd.f32 %v267, 1.0
    %v269 = vrcp.pop %v268
    %v270 = vmul.f32 1.0, %v269
    %272 = vrot.lane.b32.xlu0 %v254, 64
    %v273 = vpop.permute.xlu0 %272
    %v275 = vmul.f32 %v270, %v273
    %277 = vrot.lane.b32.xlu0 %v275, 64
    %v278 = vpop.permute.xlu0 %277
    %v280 = vadd.f32 %v256, %v278
    %v281 = vtanh.pop %v280
    %v282 = vsub.f32 1.0, %v270
    %284 = vrot.lane.b32.xlu0 %v281, 96
    %v285 = vpop.permute.xlu0 %284
    %v287 = vmul.f32 %v282, %v285
    %v288 = vmul.f32 %v270, %v149
    %v289 = vadd.f32 %v287, %v288
    %291 = vrot.lane.b32.xlu0 %v289, 96
    %v292 = vpop.permute.xlu0 %291
    %295 = vrot.lane.b32.xlu0 %v146, 32
    %v296 = vpop.permute.xlu0 %295
    %v298 = vsel %vm151, %v292, %v296
    %v299 = vld [vmem:[%s5] sm:$0xff]
    %v300 = vld [vmem:[%s5 + $0x8] sm:$0xff]
    %v301 = vld [vmem:[%s5 + $0x10] sm:$0xff]
    %v302 = vld [vmem:[%s5 + $0x18] sm:$0xff]
    %v303 = vld [vmem:[%s5 + $0x20] sm:$0xff]
    %v304 = vld [vmem:[%s5 + $0x28] sm:$0xff]
    %v305 = vld [vmem:[%s5 + $0x30] sm:$0xff]
    %v306 = vld [vmem:[%s5 + $0x38] sm:$0xff]
    %v307 = vld [vmem:[%s5 + $0x40] sm:$0xff]
    %v308 = vld [vmem:[%s5 + $0x48] sm:$0xff]
    %v309 = vld [vmem:[%s5 + $0x50] sm:$0xff]
    %v310 = vld [vmem:[%s5 + $0x58] sm:$0xff]
    %v311 = vld [vmem:[%s5 + $0x60] sm:$0xff]
    %v312 = vld [vmem:[%s5 + $0x68] sm:$0xff]
    %v313 = vld [vmem:[%s5 + $0x70] sm:$0xff]
    %v314 = vld [vmem:[%s5 + $0x78] sm:$0xff]
    %v315 = vld [vmem:[%s5 + $0x80] sm:$0xff]
    %v316 = vld [vmem:[%s5 + $0x88] sm:$0xff]
    %v317 = vld [vmem:[%s5 + $0x90] sm:$0xff]
    %v318 = vld [vmem:[%s5 + $0x98] sm:$0xff]
    %v319 = vld [vmem:[%s5 + $0xa0] sm:$0xff]
    %v320 = vld [vmem:[%s5 + $0xa8] sm:$0xff]
    %v321 = vld [vmem:[%s5 + $0xb0] sm:$0xff]
    %v322 = vld [vmem:[%s5 + $0xb8] sm:$0xff]
    %v323 = vld [vmem:[%s6] sm:$0x7]
    %v325 = vlaneseq
    %v326 = vshrl.u32 %v325, 7
    %v327 = vsub.s32 0, %v326
    %v328 = vrot.slane %v323, %v327
    %v329 = vlaneseq
    %v330 = vshrl.u32 %v329, 7
    %v331 = vsub.s32 1, %v330
    %v332 = vrot.slane %v323, %v331
    %v333 = vlaneseq
    %v334 = vshrl.u32 %v333, 7
    %v335 = vsub.s32 2, %v334
    %v336 = vrot.slane %v323, %v335
    %v341 = vsel %vm181, %v298, 0
    %343 = vmatprep.subr.mxu0 %v300
    %344 = vmatpush1.msra.mxu0 %v299
    %345 = vmatprep.subr.mxu0 %v303
    %346 = vmatpush1.msra.mxu0 %v302
    %347 = vmatprep.subr.mxu0 %v306
    %348 = vmatpush1.msra.mxu0 %v305
    %349 = vmatprep.subr.mxu0 %v309
    %350 = vmatpush1.msra.mxu0 %v308
    %351 = vmatprep.subr.mxu0 %v312
    %352 = vmatpush1.msra.mxu0 %v311
    %353 = vmatprep.subr.mxu0 %v315
    %354 = vmatpush1.msra.mxu0 %v314
    %355 = vmatprep.subr.mxu0 %v318
    %356 = vmatpush1.msra.mxu0 %v317
    %357 = vmatprep.subr.mxu0 %v321
    %358 = vmatpush1.msra.mxu0 %v320
    %359 = vmatprep.subr.mxu0 0.0
    %360 = vmatpush1.msra.mxu0 0.0
    %361 = vmatprep.subr.mxu0 0.0
    %362 = vmatpush1.msra.mxu0 0.0
    %363 = vmatprep.subr.mxu0 0.0
    %364 = vmatpush1.msra.mxu0 0.0
    %365 = vmatprep.subr.mxu0 0.0
    %366 = vmatpush1.msra.mxu0 0.0
    %367 = vmatprep.subr.mxu0 0.0
    %368 = vmatpush1.msra.mxu0 0.0
    %369 = vmatprep.subr.mxu0 0.0
    %370 = vmatpush1.msra.mxu0 0.0
    %371 = vmatprep.subr.mxu0 0.0
    %372 = vmatpush1.msra.mxu0 0.0
    %373 = vmatprep.subr.mxu0 0.0
    %374 = vmatpush1.msra.mxu0 0.0
    %375 = vmatprep.subr.mxu0 0.0
    %376 = vmatpush1.msra.mxu0 0.0
    %377 = vmatprep.subr.mxu0 0.0
    %378 = vmatpush1.msra.mxu0 0.0
    %379 = vmatprep.subr.mxu0 0.0
    %380 = vmatpush1.msra.mxu0 0.0
    %381 = vmatprep.subr.mxu0 0.0
    %382 = vmatpush1.msra.mxu0 0.0
    %383 = vmatprep.subr.mxu0 0.0
    %384 = vmatpush1.msra.mxu0 0.0
    %385 = vmatprep.subr.mxu0 0.0
    %386 = vmatpush1.msra.mxu0 0.0
    %387 = vmatprep.subr.mxu0 0.0
    %388 = vmatpush1.msra.mxu0 0.0
    %389 = vmatprep.subr.mxu0 0.0
    %390 = vmatpush1.msra.mxu0 0.0
    %391 = vmatprep.subr.mxu0 0.0
    %392 = vmatpush1.msra.mxu0 0.0
    %393 = vmatprep.subr.mxu0 0.0
    %394 = vmatpush1.msra.mxu0 0.0
    %395 = vmatprep.subr.mxu0 0.0
    %396 = vmatpush1.msra.mxu0 0.0
    %397 = vmatprep.subr.mxu0 0.0
    %398 = vmatpush1.msra.mxu0 0.0
    %399 = vmatprep.subr.mxu0 0.0
    %400 = vmatpush1.msra.mxu0 0.0
    %401 = vmatprep.subr.mxu0 0.0
    %402 = vmatpush1.msra.mxu0 0.0
    %403 = vmatprep.subr.mxu0 0.0
    %404 = vmatpush1.msra.mxu0 0.0
    %405 = vmatprep.subr.mxu0 0.0
    %406 = vmatpush1.msra.mxu0 0.0
    %407 = vmatprep.mubr.f32.mxu0 0.0
    %408 = vmatmul.mubr.f32.gmra.mrb[0].mxu0 %v341
    %v409 = vpop.f32.mrb[0].mxu0
    %v410 = vadd.f32 %v328, %v409
    %v411 = vpop.f32.mrb[0].mxu0
    %v412 = vadd.f32 %v332, %v411
    %413 = vdwg.mxu0
    %414 = vmatprep.subr.mxu0 0.0
    %415 = vmatpush1.msra.mxu0 %v301
    %416 = vmatprep.subr.mxu0 0.0
    %417 = vmatpush1.msra.mxu0 %v304
    %418 = vmatprep.subr.mxu0 0.0
    %419 = vmatpush1.msra.mxu0 %v307
    %420 = vmatprep.subr.mxu0 0.0
    %421 = vmatpush1.msra.mxu0 %v310
    %422 = vmatprep.subr.mxu0 0.0
    %423 = vmatpush1.msra.mxu0 %v313
    %424 = vmatprep.subr.mxu0 0.0
    %425 = vmatpush1.msra.mxu0 %v316
    %426 = vmatprep.subr.mxu0 0.0
    %427 = vmatpush1.msra.mxu0 %v319
    %428 = vmatprep.subr.mxu0 0.0
    %429 = vmatpush1.msra.mxu0 %v322
    %430 = vmatprep.subr.mxu0 0.0
    %431 = vmatpush1.msra.mxu0 0.0
    %432 = vmatprep.subr.mxu0 0.0
    %433 = vmatpush1.msra.mxu0 0.0
    %434 = vmatprep.subr.mxu0 0.0
    %435 = vmatpush1.msra.mxu0 0.0
    %436 = vmatprep.subr.mxu0 0.0
    %437 = vmatpush1.msra.mxu0 0.0
    %438 = vmatprep.subr.mxu0 0.0
    %439 = vmatpush1.msra.mxu0 0.0
    %440 = vmatprep.subr.mxu0 0.0
    %441 = vmatpush1.msra.mxu0 0.0
    %442 = vmatprep.subr.mxu0 0.0
    %443 = vmatpush1.msra.mxu0 0.0
    %444 = vmatprep.subr.mxu0 0.0
    %445 = vmatpush1.msra.mxu0 0.0
    %446 = vmatprep.subr.mxu0 0.0
    %447 = vmatpush1.msra.mxu0 0.0
    %448 = vmatprep.subr.mxu0 0.0
    %449 = vmatpush1.msra.mxu0 0.0
    %450 = vmatprep.subr.mxu0 0.0
    %451 = vmatpush1.msra.mxu0 0.0
    %452 = vmatprep.subr.mxu0 0.0
    %453 = vmatpush1.msra.mxu0 0.0
    %454 = vmatprep.subr.mxu0 0.0
    %455 = vmatpush1.msra.mxu0 0.0
    %456 = vmatprep.subr.mxu0 0.0
    %457 = vmatpush1.msra.mxu0 0.0
    %458 = vmatprep.subr.mxu0 0.0
    %459 = vmatpush1.msra.mxu0 0.0
    %460 = vmatprep.subr.mxu0 0.0
    %461 = vmatpush1.msra.mxu0 0.0
    %462 = vmatprep.subr.mxu0 0.0
    %463 = vmatpush1.msra.mxu0 0.0
    %464 = vmatprep.subr.mxu0 0.0
    %465 = vmatpush1.msra.mxu0 0.0
    %466 = vmatprep.subr.mxu0 0.0
    %467 = vmatpush1.msra.mxu0 0.0
    %468 = vmatprep.subr.mxu0 0.0
    %469 = vmatpush1.msra.mxu0 0.0
    %470 = vmatprep.subr.mxu0 0.0
    %471 = vmatpush1.msra.mxu0 0.0
    %472 = vmatprep.subr.mxu0 0.0
    %473 = vmatpush1.msra.mxu0 0.0
    %474 = vmatprep.subr.mxu0 0.0
    %475 = vmatpush1.msra.mxu0 0.0
    %476 = vmatprep.subr.mxu0 0.0
    %477 = vmatpush1.msra.mxu0 0.0
    %478 = vmatprep.mubr.f32.mxu0 0.0
    %479 = vmatmul.mubr.f32.gmra.mrb[0].mxu0 %v341
    %v480 = vpop.f32.mrb[0].mxu0
    %v481 = vadd.f32 %v336, %v480
    %v482 = vpop.f32.mrb[0].mxu0
    %483 = vdwg.mxu0
    %v484 = vadd.f32 %v410, %v481
    %v485 = vxor.u32 %v484, 2147483648
    %v486 = vmul.f32 %v485, 1.442695
    %v487 = vpow.pop %v486
    %v488 = vadd.f32 %v487, 1.0
    %v489 = vrcp.pop %v488
    %v490 = vmul.f32 1.0, %v489
    %492 = vrot.lane.b32.xlu0 %v481, 64
    %v493 = vpop.permute.xlu0 %492
    %v495 = vmul.f32 %v490, %v493
    %497 = vrot.lane.b32.xlu0 %v495, 64
    %v498 = vpop.permute.xlu0 %497
    %v500 = vadd.f32 %v410, %v498
    %v501 = vtanh.pop %v500
    %v502 = vsub.f32 1.0, %v490
    %504 = vrot.lane.b32.xlu0 %v501, 96
    %v505 = vpop.permute.xlu0 %504
    %v507 = vmul.f32 %v502, %v505
    %v508 = vmul.f32 %v490, %v296
    %v509 = vadd.f32 %v507, %v508
    %v510 = vadd.f32 %v257, %v412
    %v511 = vxor.u32 %v510, 2147483648
    %v512 = vmul.f32 %v511, 1.442695
    %v513 = vpow.pop %v512
    %v514 = vadd.f32 %v513, 1.0
    %v515 = vrcp.pop %v514
    %v516 = vmul.f32 1.0, %v515
    %518 = vrot.lane.b32.xlu0 %v412, 64
    %v519 = vpop.permute.xlu0 %518
    %v521 = vmul.f32 %v516, %v519
    %523 = vrot.lane.b32.xlu0 %v521, 64
    %v524 = vpop.permute.xlu0 %523
    %v526 = vadd.f32 %v257, %v524
    %v527 = vtanh.pop %v526
    %v528 = vsub.f32 1.0, %v516
    %530 = vrot.lane.b32.xlu0 %v527, 96
    %v531 = vpop.permute.xlu0 %530
    %v533 = vmul.f32 %v528, %v531
    %v534 = vmul.f32 %v516, %v289
    %v535 = vadd.f32 %v533, %v534
    %537 = vrot.lane.b32.xlu0 %v535, 96
    %v538 = vpop.permute.xlu0 %537
    %v540 = vsel %vm151, %v538, %v509
    %v542 = vsel %vm181, %v540, 0
    %544 = vmatprep.subr.mxu0 %v300
    %545 = vmatpush1.msra.mxu0 %v299
    %546 = vmatprep.subr.mxu0 %v303
    %547 = vmatpush1.msra.mxu0 %v302
    %548 = vmatprep.subr.mxu0 %v306
    %549 = vmatpush1.msra.mxu0 %v305
    %550 = vmatprep.subr.mxu0 %v309
    %551 = vmatpush1.msra.mxu0 %v308
    %552 = vmatprep.subr.mxu0 %v312
    %553 = vmatpush1.msra.mxu0 %v311
    %554 = vmatprep.subr.mxu0 %v315
    %555 = vmatpush1.msra.mxu0 %v314
    %556 = vmatprep.subr.mxu0 %v318
    %557 = vmatpush1.msra.mxu0 %v317
    %558 = vmatprep.subr.mxu0 %v321
    %559 = vmatpush1.msra.mxu0 %v320
    %560 = vmatprep.subr.mxu0 0.0
    %561 = vmatpush1.msra.mxu0 0.0
    %562 = vmatprep.subr.mxu0 0.0
    %563 = vmatpush1.msra.mxu0 0.0
    %564 = vmatprep.subr.mxu0 0.0
    %565 = vmatpush1.msra.mxu0 0.0
    %566 = vmatprep.subr.mxu0 0.0
    %567 = vmatpush1.msra.mxu0 0.0
    %568 = vmatprep.subr.mxu0 0.0
    %569 = vmatpush1.msra.mxu0 0.0
    %570 = vmatprep.subr.mxu0 0.0
    %571 = vmatpush1.msra.mxu0 0.0
    %572 = vmatprep.subr.mxu0 0.0
    %573 = vmatpush1.msra.mxu0 0.0
    %574 = vmatprep.subr.mxu0 0.0
    %575 = vmatpush1.msra.mxu0 0.0
    %576 = vmatprep.subr.mxu0 0.0
    %577 = vmatpush1.msra.mxu0 0.0
    %578 = vmatprep.subr.mxu0 0.0
    %579 = vmatpush1.msra.mxu0 0.0
    %580 = vmatprep.subr.mxu0 0.0
    %581 = vmatpush1.msra.mxu0 0.0
    %582 = vmatprep.subr.mxu0 0.0
    %583 = vmatpush1.msra.mxu0 0.0
    %584 = vmatprep.subr.mxu0 0.0
    %585 = vmatpush1.msra.mxu0 0.0
    %586 = vmatprep.subr.mxu0 0.0
    %587 = vmatpush1.msra.mxu0 0.0
    %588 = vmatprep.subr.mxu0 0.0
    %589 = vmatpush1.msra.mxu0 0.0
    %590 = vmatprep.subr.mxu0 0.0
    %591 = vmatpush1.msra.mxu0 0.0
    %592 = vmatprep.subr.mxu0 0.0
    %593 = vmatpush1.msra.mxu0 0.0
    %594 = vmatprep.subr.mxu0 0.0
    %595 = vmatpush1.msra.mxu0 0.0
    %596 = vmatprep.subr.mxu0 0.0
    %597 = vmatpush1.msra.mxu0 0.0
    %598 = vmatprep.subr.mxu0 0.0
    %599 = vmatpush1.msra.mxu0 0.0
    %600 = vmatprep.subr.mxu0 0.0
    %601 = vmatpush1.msra.mxu0 0.0
    %602 = vmatprep.subr.mxu0 0.0
    %603 = vmatpush1.msra.mxu0 0.0
    %604 = vmatprep.subr.mxu0 0.0
    %605 = vmatpush1.msra.mxu0 0.0
    %606 = vmatprep.subr.mxu0 0.0
    %607 = vmatpush1.msra.mxu0 0.0
    %608 = vmatprep.mubr.f32.mxu0 0.0
    %609 = vmatmul.mubr.f32.gmra.mrb[0].mxu0 %v542
    %v610 = vpop.f32.mrb[0].mxu0
    %v611 = vadd.f32 %v328, %v610
    %v612 = vpop.f32.mrb[0].mxu0
    %v613 = vadd.f32 %v332, %v612
    %614 = vdwg.mxu0
    %615 = vmatprep.subr.mxu0 0.0
    %616 = vmatpush1.msra.mxu0 %v301
    %617 = vmatprep.subr.mxu0 0.0
    %618 = vmatpush1.msra.mxu0 %v304
    %619 = vmatprep.subr.mxu0 0.0
    %620 = vmatpush1.msra.mxu0 %v307
    %621 = vmatprep.subr.mxu0 0.0
    %622 = vmatpush1.msra.mxu0 %v310
    %623 = vmatprep.subr.mxu0 0.0
    %624 = vmatpush1.msra.mxu0 %v313
    %625 = vmatprep.subr.mxu0 0.0
    %626 = vmatpush1.msra.mxu0 %v316
    %627 = vmatprep.subr.mxu0 0.0
    %628 = vmatpush1.msra.mxu0 %v319
    %629 = vmatprep.subr.mxu0 0.0
    %630 = vmatpush1.msra.mxu0 %v322
    %631 = vmatprep.subr.mxu0 0.0
    %632 = vmatpush1.msra.mxu0 0.0
    %633 = vmatprep.subr.mxu0 0.0
    %634 = vmatpush1.msra.mxu0 0.0
    %635 = vmatprep.subr.mxu0 0.0
    %636 = vmatpush1.msra.mxu0 0.0
    %637 = vmatprep.subr.mxu0 0.0
    %638 = vmatpush1.msra.mxu0 0.0
    %639 = vmatprep.subr.mxu0 0.0
    %640 = vmatpush1.msra.mxu0 0.0
    %641 = vmatprep.subr.mxu0 0.0
    %642 = vmatpush1.msra.mxu0 0.0
    %643 = vmatprep.subr.mxu0 0.0
    %644 = vmatpush1.msra.mxu0 0.0
    %645 = vmatprep.subr.mxu0 0.0
    %646 = vmatpush1.msra.mxu0 0.0
    %647 = vmatprep.subr.mxu0 0.0
    %648 = vmatpush1.msra.mxu0 0.0
    %649 = vmatprep.subr.mxu0 0.0
    %650 = vmatpush1.msra.mxu0 0.0
    %651 = vmatprep.subr.mxu0 0.0
    %652 = vmatpush1.msra.mxu0 0.0
    %653 = vmatprep.subr.mxu0 0.0
    %654 = vmatpush1.msra.mxu0 0.0
    %655 = vmatprep.subr.mxu0 0.0
    %656 = vmatpush1.msra.mxu0 0.0
    %657 = vmatprep.subr.mxu0 0.0
    %658 = vmatpush1.msra.mxu0 0.0
    %659 = vmatprep.subr.mxu0 0.0
    %660 = vmatpush1.msra.mxu0 0.0
    %661 = vmatprep.subr.mxu0 0.0
    %662 = vmatpush1.msra.mxu0 0.0
    %663 = vmatprep.subr.mxu0 0.0
    %664 = vmatpush1.msra.mxu0 0.0
    %665 = vmatprep.subr.mxu0 0.0
    %666 = vmatpush1.msra.mxu0 0.0
    %667 = vmatprep.subr.mxu0 0.0
    %668 = vmatpush1.msra.mxu0 0.0
    %669 = vmatprep.subr.mxu0 0.0
    %670 = vmatpush1.msra.mxu0 0.0
    %671 = vmatprep.subr.mxu0 0.0
    %672 = vmatpush1.msra.mxu0 0.0
    %673 = vmatprep.subr.mxu0 0.0
    %674 = vmatpush1.msra.mxu0 0.0
    %675 = vmatprep.subr.mxu0 0.0
    %676 = vmatpush1.msra.mxu0 0.0
    %677 = vmatprep.subr.mxu0 0.0
    %678 = vmatpush1.msra.mxu0 0.0
    %679 = vmatprep.mubr.f32.mxu0 0.0
    %680 = vmatmul.mubr.f32.gmra.mrb[0].mxu0 %v542
    %v681 = vpop.f32.mrb[0].mxu0
    %v682 = vadd.f32 %v336, %v681
    %v683 = vpop.f32.mrb[0].mxu0
    %684 = vdwg.mxu0
    %v685 = vadd.f32 %v611, %v682
    %v686 = vxor.u32 %v685, 2147483648
    %v687 = vmul.f32 %v686, 1.442695
    %v688 = vpow.pop %v687
    %v689 = vadd.f32 %v688, 1.0
    %v690 = vrcp.pop %v689
    %v691 = vmul.f32 1.0, %v690
    %693 = vrot.lane.b32.xlu0 %v682, 64
    %v694 = vpop.permute.xlu0 %693
    %v696 = vmul.f32 %v691, %v694
    %698 = vrot.lane.b32.xlu0 %v696, 64
    %v699 = vpop.permute.xlu0 %698
    %v701 = vadd.f32 %v611, %v699
    %v702 = vtanh.pop %v701
    %v703 = vsub.f32 1.0, %v691
    %705 = vrot.lane.b32.xlu0 %v702, 96
    %v706 = vpop.permute.xlu0 %705
    %v708 = vmul.f32 %v703, %v706
    %v709 = vmul.f32 %v691, %v509
    %v710 = vadd.f32 %v708, %v709
    %v711 = vadd.f32 %v258, %v613
    %v712 = vxor.u32 %v711, 2147483648
    %v713 = vmul.f32 %v712, 1.442695
    %v714 = vpow.pop %v713
    %v715 = vadd.f32 %v714, 1.0
    %v716 = vrcp.pop %v715
    %v717 = vmul.f32 1.0, %v716
    %719 = vrot.lane.b32.xlu0 %v613, 64
    %v720 = vpop.permute.xlu0 %719
    %v722 = vmul.f32 %v717, %v720
    %724 = vrot.lane.b32.xlu0 %v722, 64
    %v725 = vpop.permute.xlu0 %724
    %v727 = vadd.f32 %v258, %v725
    %v728 = vtanh.pop %v727
    %v729 = vsub.f32 1.0, %v717
    %731 = vrot.lane.b32.xlu0 %v728, 96
    %v732 = vpop.permute.xlu0 %731
    %v734 = vmul.f32 %v729, %v732
    %v735 = vmul.f32 %v717, %v535
    %v736 = vadd.f32 %v734, %v735
    %738 = vrot.lane.b32.xlu0 %v736, 96
    %v739 = vpop.permute.xlu0 %738
    %v741 = vsel %vm151, %v739, %v710
    %v743 = vsel %vm181, %v741, 0
    %745 = vmatprep.subr.mxu0 %v300
    %746 = vmatpush1.msra.mxu0 %v299
    %747 = vmatprep.subr.mxu0 %v303
    %748 = vmatpush1.msra.mxu0 %v302
    %749 = vmatprep.subr.mxu0 %v306
    %750 = vmatpush1.msra.mxu0 %v305
    %751 = vmatprep.subr.mxu0 %v309
    %752 = vmatpush1.msra.mxu0 %v308
    %753 = vmatprep.subr.mxu0 %v312
    %754 = vmatpush1.msra.mxu0 %v311
    %755 = vmatprep.subr.mxu0 %v315
    %756 = vmatpush1.msra.mxu0 %v314
    %757 = vmatprep.subr.mxu0 %v318
    %758 = vmatpush1.msra.mxu0 %v317
    %759 = vmatprep.subr.mxu0 %v321
    %760 = vmatpush1.msra.mxu0 %v320
    %761 = vmatprep.subr.mxu0 0.0
    %762 = vmatpush1.msra.mxu0 0.0
    %763 = vmatprep.subr.mxu0 0.0
    %764 = vmatpush1.msra.mxu0 0.0
    %765 = vmatprep.subr.mxu0 0.0
    %766 = vmatpush1.msra.mxu0 0.0
    %767 = vmatprep.subr.mxu0 0.0
    %768 = vmatpush1.msra.mxu0 0.0
    %769 = vmatprep.subr.mxu0 0.0
    %770 = vmatpush1.msra.mxu0 0.0
    %771 = vmatprep.subr.mxu0 0.0
    %772 = vmatpush1.msra.mxu0 0.0
    %773 = vmatprep.subr.mxu0 0.0
    %774 = vmatpush1.msra.mxu0 0.0
    %775 = vmatprep.subr.mxu0 0.0
    %776 = vmatpush1.msra.mxu0 0.0
    %777 = vmatprep.subr.mxu0 0.0
    %778 = vmatpush1.msra.mxu0 0.0
    %779 = vmatprep.subr.mxu0 0.0
    %780 = vmatpush1.msra.mxu0 0.0
    %781 = vmatprep.subr.mxu0 0.0
    %782 = vmatpush1.msra.mxu0 0.0
    %783 = vmatprep.subr.mxu0 0.0
    %784 = vmatpush1.msra.mxu0 0.0
    %785 = vmatprep.subr.mxu0 0.0
    %786 = vmatpush1.msra.mxu0 0.0
    %787 = vmatprep.subr.mxu0 0.0
    %788 = vmatpush1.msra.mxu0 0.0
    %789 = vmatprep.subr.mxu0 0.0
    %790 = vmatpush1.msra.mxu0 0.0
    %791 = vmatprep.subr.mxu0 0.0
    %792 = vmatpush1.msra.mxu0 0.0
    %793 = vmatprep.subr.mxu0 0.0
    %794 = vmatpush1.msra.mxu0 0.0
    %795 = vmatprep.subr.mxu0 0.0
    %796 = vmatpush1.msra.mxu0 0.0
    %797 = vmatprep.subr.mxu0 0.0
    %798 = vmatpush1.msra.mxu0 0.0
    %799 = vmatprep.subr.mxu0 0.0
    %800 = vmatpush1.msra.mxu0 0.0
    %801 = vmatprep.subr.mxu0 0.0
    %802 = vmatpush1.msra.mxu0 0.0
    %803 = vmatprep.subr.mxu0 0.0
    %804 = vmatpush1.msra.mxu0 0.0
    %805 = vmatprep.subr.mxu0 0.0
    %806 = vmatpush1.msra.mxu0 0.0
    %807 = vmatprep.subr.mxu0 0.0
    %808 = vmatpush1.msra.mxu0 0.0
    %809 = vmatprep.mubr.f32.mxu0 0.0
    %810 = vmatmul.mubr.f32.gmra.mrb[0].mxu0 %v743
    %v811 = vpop.f32.mrb[0].mxu0
    %v812 = vadd.f32 %v328, %v811
    %v813 = vpop.f32.mrb[0].mxu0
    %v814 = vadd.f32 %v332, %v813
    %815 = vdwg.mxu0
    %816 = vmatprep.subr.mxu0 0.0
    %817 = vmatpush1.msra.mxu0 %v301
    %818 = vmatprep.subr.mxu0 0.0
    %819 = vmatpush1.msra.mxu0 %v304
    %820 = vmatprep.subr.mxu0 0.0
    %821 = vmatpush1.msra.mxu0 %v307
    %822 = vmatprep.subr.mxu0 0.0
    %823 = vmatpush1.msra.mxu0 %v310
    %824 = vmatprep.subr.mxu0 0.0
    %825 = vmatpush1.msra.mxu0 %v313
    %826 = vmatprep.subr.mxu0 0.0
    %827 = vmatpush1.msra.mxu0 %v316
    %828 = vmatprep.subr.mxu0 0.0
    %829 = vmatpush1.msra.mxu0 %v319
    %830 = vmatprep.subr.mxu0 0.0
    %831 = vmatpush1.msra.mxu0 %v322
    %832 = vmatprep.subr.mxu0 0.0
    %833 = vmatpush1.msra.mxu0 0.0
    %834 = vmatprep.subr.mxu0 0.0
    %835 = vmatpush1.msra.mxu0 0.0
    %836 = vmatprep.subr.mxu0 0.0
    %837 = vmatpush1.msra.mxu0 0.0
    %838 = vmatprep.subr.mxu0 0.0
    %839 = vmatpush1.msra.mxu0 0.0
    %840 = vmatprep.subr.mxu0 0.0
    %841 = vmatpush1.msra.mxu0 0.0
    %842 = vmatprep.subr.mxu0 0.0
    %843 = vmatpush1.msra.mxu0 0.0
    %844 = vmatprep.subr.mxu0 0.0
    %845 = vmatpush1.msra.mxu0 0.0
    %846 = vmatprep.subr.mxu0 0.0
    %847 = vmatpush1.msra.mxu0 0.0
    %848 = vmatprep.subr.mxu0 0.0
    %849 = vmatpush1.msra.mxu0 0.0
    %850 = vmatprep.subr.mxu0 0.0
    %851 = vmatpush1.msra.mxu0 0.0
    %852 = vmatprep.subr.mxu0 0.0
    %853 = vmatpush1.msra.mxu0 0.0
    %854 = vmatprep.subr.mxu0 0.0
    %855 = vmatpush1.msra.mxu0 0.0
    %856 = vmatprep.subr.mxu0 0.0
    %857 = vmatpush1.msra.mxu0 0.0
    %858 = vmatprep.subr.mxu0 0.0
    %859 = vmatpush1.msra.mxu0 0.0
    %860 = vmatprep.subr.mxu0 0.0
    %861 = vmatpush1.msra.mxu0 0.0
    %862 = vmatprep.subr.mxu0 0.0
    %863 = vmatpush1.msra.mxu0 0.0
    %864 = vmatprep.subr.mxu0 0.0
    %865 = vmatpush1.msra.mxu0 0.0
    %866 = vmatprep.subr.mxu0 0.0
    %867 = vmatpush1.msra.mxu0 0.0
    %868 = vmatprep.subr.mxu0 0.0
    %869 = vmatpush1.msra.mxu0 0.0
    %870 = vmatprep.subr.mxu0 0.0
    %871 = vmatpush1.msra.mxu0 0.0
    %872 = vmatprep.subr.mxu0 0.0
    %873 = vmatpush1.msra.mxu0 0.0
    %874 = vmatprep.subr.mxu0 0.0
    %875 = vmatpush1.msra.mxu0 0.0
    %876 = vmatprep.subr.mxu0 0.0
    %877 = vmatpush1.msra.mxu0 0.0
    %878 = vmatprep.subr.mxu0 0.0
    %879 = vmatpush1.msra.mxu0 0.0
    %880 = vmatprep.mubr.f32.mxu0 0.0
    %881 = vmatmul.mubr.f32.gmra.mrb[0].mxu0 %v743
    %v882 = vpop.f32.mrb[0].mxu0
    %v883 = vadd.f32 %v336, %v882
    %v884 = vpop.f32.mrb[0].mxu0
    %885 = vdwg.mxu0
    %v886 = vadd.f32 %v812, %v883
    %v887 = vxor.u32 %v886, 2147483648
    %v888 = vmul.f32 %v887, 1.442695
    %v889 = vpow.pop %v888
    %v890 = vadd.f32 %v889, 1.0
    %v891 = vrcp.pop %v890
    %v892 = vmul.f32 1.0, %v891
    %894 = vrot.lane.b32.xlu0 %v883, 64
    %v895 = vpop.permute.xlu0 %894
    %v897 = vmul.f32 %v892, %v895
    %899 = vrot.lane.b32.xlu0 %v897, 64
    %v900 = vpop.permute.xlu0 %899
    %v902 = vadd.f32 %v812, %v900
    %v903 = vtanh.pop %v902
    %v904 = vsub.f32 1.0, %v892
    %906 = vrot.lane.b32.xlu0 %v903, 96
    %v907 = vpop.permute.xlu0 %906
    %v909 = vmul.f32 %v904, %v907
    %v910 = vmul.f32 %v892, %v710
    %v911 = vadd.f32 %v909, %v910
    %v912 = vadd.f32 %v259, %v814
    %v913 = vxor.u32 %v912, 2147483648
    %v914 = vmul.f32 %v913, 1.442695
    %v915 = vpow.pop %v914
    %v916 = vadd.f32 %v915, 1.0
    %v917 = vrcp.pop %v916
    %v918 = vmul.f32 1.0, %v917
    %920 = vrot.lane.b32.xlu0 %v814, 64
    %v921 = vpop.permute.xlu0 %920
    %v923 = vmul.f32 %v918, %v921
    %925 = vrot.lane.b32.xlu0 %v923, 64
    %v926 = vpop.permute.xlu0 %925
    %v928 = vadd.f32 %v259, %v926
    %v929 = vtanh.pop %v928
    %v930 = vsub.f32 1.0, %v918
    %932 = vrot.lane.b32.xlu0 %v929, 96
    %v933 = vpop.permute.xlu0 %932
    %v935 = vmul.f32 %v930, %v933
    %v936 = vmul.f32 %v918, %v736
    %v937 = vadd.f32 %v935, %v936
    %939 = vrot.lane.b32.xlu0 %v937, 96
    %v940 = vpop.permute.xlu0 %939
    %v942 = vsel %vm151, %v940, %v911
    %v944 = vsel %vm181, %v942, 0
    %946 = vmatprep.subr.mxu0 %v300
    %947 = vmatpush1.msra.mxu0 %v299
    %948 = vmatprep.subr.mxu0 %v303
    %949 = vmatpush1.msra.mxu0 %v302
    %950 = vmatprep.subr.mxu0 %v306
    %951 = vmatpush1.msra.mxu0 %v305
    %952 = vmatprep.subr.mxu0 %v309
    %953 = vmatpush1.msra.mxu0 %v308
    %954 = vmatprep.subr.mxu0 %v312
    %955 = vmatpush1.msra.mxu0 %v311
    %956 = vmatprep.subr.mxu0 %v315
    %957 = vmatpush1.msra.mxu0 %v314
    %958 = vmatprep.subr.mxu0 %v318
    %959 = vmatpush1.msra.mxu0 %v317
    %960 = vmatprep.subr.mxu0 %v321
    %961 = vmatpush1.msra.mxu0 %v320
    %962 = vmatprep.subr.mxu0 0.0
    %963 = vmatpush1.msra.mxu0 0.0
    %964 = vmatprep.subr.mxu0 0.0
    %965 = vmatpush1.msra.mxu0 0.0
    %966 = vmatprep.subr.mxu0 0.0
    %967 = vmatpush1.msra.mxu0 0.0
    %968 = vmatprep.subr.mxu0 0.0
    %969 = vmatpush1.msra.mxu0 0.0
    %970 = vmatprep.subr.mxu0 0.0
    %971 = vmatpush1.msra.mxu0 0.0
    %972 = vmatprep.subr.mxu0 0.0
    %973 = vmatpush1.msra.mxu0 0.0
    %974 = vmatprep.subr.mxu0 0.0
    %975 = vmatpush1.msra.mxu0 0.0
    %976 = vmatprep.subr.mxu0 0.0
    %977 = vmatpush1.msra.mxu0 0.0
    %978 = vmatprep.subr.mxu0 0.0
    %979 = vmatpush1.msra.mxu0 0.0
    %980 = vmatprep.subr.mxu0 0.0
    %981 = vmatpush1.msra.mxu0 0.0
    %982 = vmatprep.subr.mxu0 0.0
    %983 = vmatpush1.msra.mxu0 0.0
    %984 = vmatprep.subr.mxu0 0.0
    %985 = vmatpush1.msra.mxu0 0.0
    %986 = vmatprep.subr.mxu0 0.0
    %987 = vmatpush1.msra.mxu0 0.0
    %988 = vmatprep.subr.mxu0 0.0
    %989 = vmatpush1.msra.mxu0 0.0
    %990 = vmatprep.subr.mxu0 0.0
    %991 = vmatpush1.msra.mxu0 0.0
    %992 = vmatprep.subr.mxu0 0.0
    %993 = vmatpush1.msra.mxu0 0.0
    %994 = vmatprep.subr.mxu0 0.0
    %995 = vmatpush1.msra.mxu0 0.0
    %996 = vmatprep.subr.mxu0 0.0
    %997 = vmatpush1.msra.mxu0 0.0
    %998 = vmatprep.subr.mxu0 0.0
    %999 = vmatpush1.msra.mxu0 0.0
    %1000 = vmatprep.subr.mxu0 0.0
    %1001 = vmatpush1.msra.mxu0 0.0
    %1002 = vmatprep.subr.mxu0 0.0
    %1003 = vmatpush1.msra.mxu0 0.0
    %1004 = vmatprep.subr.mxu0 0.0
    %1005 = vmatpush1.msra.mxu0 0.0
    %1006 = vmatprep.subr.mxu0 0.0
    %1007 = vmatpush1.msra.mxu0 0.0
    %1008 = vmatprep.subr.mxu0 0.0
    %1009 = vmatpush1.msra.mxu0 0.0
    %1010 = vmatprep.mubr.f32.mxu0 0.0
    %1011 = vmatmul.mubr.f32.gmra.mrb[0].mxu0 %v944
    %v1012 = vpop.f32.mrb[0].mxu0
    %v1013 = vadd.f32 %v328, %v1012
    %v1014 = vpop.f32.mrb[0].mxu0
    %v1015 = vadd.f32 %v332, %v1014
    %1016 = vdwg.mxu0
    %1017 = vmatprep.subr.mxu0 0.0
    %1018 = vmatpush1.msra.mxu0 %v301
    %1019 = vmatprep.subr.mxu0 0.0
    %1020 = vmatpush1.msra.mxu0 %v304
    %1021 = vmatprep.subr.mxu0 0.0
    %1022 = vmatpush1.msra.mxu0 %v307
    %1023 = vmatprep.subr.mxu0 0.0
    %1024 = vmatpush1.msra.mxu0 %v310
    %1025 = vmatprep.subr.mxu0 0.0
    %1026 = vmatpush1.msra.mxu0 %v313
    %1027 = vmatprep.subr.mxu0 0.0
    %1028 = vmatpush1.msra.mxu0 %v316
    %1029 = vmatprep.subr.mxu0 0.0
    %1030 = vmatpush1.msra.mxu0 %v319
    %1031 = vmatprep.subr.mxu0 0.0
    %1032 = vmatpush1.msra.mxu0 %v322
    %1033 = vmatprep.subr.mxu0 0.0
    %1034 = vmatpush1.msra.mxu0 0.0
    %1035 = vmatprep.subr.mxu0 0.0
    %1036 = vmatpush1.msra.mxu0 0.0
    %1037 = vmatprep.subr.mxu0 0.0
    %1038 = vmatpush1.msra.mxu0 0.0
    %1039 = vmatprep.subr.mxu0 0.0
    %1040 = vmatpush1.msra.mxu0 0.0
    %1041 = vmatprep.subr.mxu0 0.0
    %1042 = vmatpush1.msra.mxu0 0.0
    %1043 = vmatprep.subr.mxu0 0.0
    %1044 = vmatpush1.msra.mxu0 0.0
    %1045 = vmatprep.subr.mxu0 0.0
    %1046 = vmatpush1.msra.mxu0 0.0
    %1047 = vmatprep.subr.mxu0 0.0
    %1048 = vmatpush1.msra.mxu0 0.0
    %1049 = vmatprep.subr.mxu0 0.0
    %1050 = vmatpush1.msra.mxu0 0.0
    %1051 = vmatprep.subr.mxu0 0.0
    %1052 = vmatpush1.msra.mxu0 0.0
    %1053 = vmatprep.subr.mxu0 0.0
    %1054 = vmatpush1.msra.mxu0 0.0
    %1055 = vmatprep.subr.mxu0 0.0
    %1056 = vmatpush1.msra.mxu0 0.0
    %1057 = vmatprep.subr.mxu0 0.0
    %1058 = vmatpush1.msra.mxu0 0.0
    %1059 = vmatprep.subr.mxu0 0.0
    %1060 = vmatpush1.msra.mxu0 0.0
    %1061 = vmatprep.subr.mxu0 0.0
    %1062 = vmatpush1.msra.mxu0 0.0
    %1063 = vmatprep.subr.mxu0 0.0
    %1064 = vmatpush1.msra.mxu0 0.0
    %1065 = vmatprep.subr.mxu0 0.0
    %1066 = vmatpush1.msra.mxu0 0.0
    %1067 = vmatprep.subr.mxu0 0.0
    %1068 = vmatpush1.msra.mxu0 0.0
    %1069 = vmatprep.subr.mxu0 0.0
    %1070 = vmatpush1.msra.mxu0 0.0
    %1071 = vmatprep.subr.mxu0 0.0
    %1072 = vmatpush1.msra.mxu0 0.0
    %1073 = vmatprep.subr.mxu0 0.0
    %1074 = vmatpush1.msra.mxu0 0.0
    %1075 = vmatprep.subr.mxu0 0.0
    %1076 = vmatpush1.msra.mxu0 0.0
    %1077 = vmatprep.subr.mxu0 0.0
    %1078 = vmatpush1.msra.mxu0 0.0
    %1079 = vmatprep.subr.mxu0 0.0
    %1080 = vmatpush1.msra.mxu0 0.0
    %1081 = vmatprep.mubr.f32.mxu0 0.0
    %1082 = vmatmul.mubr.f32.gmra.mrb[0].mxu0 %v944
    %v1083 = vpop.f32.mrb[0].mxu0
    %v1084 = vadd.f32 %v336, %v1083
    %v1085 = vpop.f32.mrb[0].mxu0
    %1086 = vdwg.mxu0
    %v1087 = vadd.f32 %v1013, %v1084
    %v1088 = vxor.u32 %v1087, 2147483648
    %v1089 = vmul.f32 %v1088, 1.442695
    %v1090 = vpow.pop %v1089
    %v1091 = vadd.f32 %v1090, 1.0
    %v1092 = vrcp.pop %v1091
    %v1093 = vmul.f32 1.0, %v1092
    %1095 = vrot.lane.b32.xlu0 %v1084, 64
    %v1096 = vpop.permute.xlu0 %1095
    %v1098 = vmul.f32 %v1093, %v1096
    %1100 = vrot.lane.b32.xlu0 %v1098, 64
    %v1101 = vpop.permute.xlu0 %1100
    %v1103 = vadd.f32 %v1013, %v1101
    %v1104 = vtanh.pop %v1103
    %v1105 = vsub.f32 1.0, %v1093
    %1107 = vrot.lane.b32.xlu0 %v1104, 96
    %v1108 = vpop.permute.xlu0 %1107
    %v1110 = vmul.f32 %v1105, %v1108
    %v1111 = vmul.f32 %v1093, %v911
    %v1112 = vadd.f32 %v1110, %v1111
    %v1113 = vadd.f32 %v260, %v1015
    %v1114 = vxor.u32 %v1113, 2147483648
    %v1115 = vmul.f32 %v1114, 1.442695
    %v1116 = vpow.pop %v1115
    %v1117 = vadd.f32 %v1116, 1.0
    %v1118 = vrcp.pop %v1117
    %v1119 = vmul.f32 1.0, %v1118
    %1121 = vrot.lane.b32.xlu0 %v1015, 64
    %v1122 = vpop.permute.xlu0 %1121
    %v1124 = vmul.f32 %v1119, %v1122
    %1126 = vrot.lane.b32.xlu0 %v1124, 64
    %v1127 = vpop.permute.xlu0 %1126
    %v1129 = vadd.f32 %v260, %v1127
    %v1130 = vtanh.pop %v1129
    %v1131 = vsub.f32 1.0, %v1119
    %1133 = vrot.lane.b32.xlu0 %v1130, 96
    %v1134 = vpop.permute.xlu0 %1133
    %v1136 = vmul.f32 %v1131, %v1134
    %v1137 = vmul.f32 %v1119, %v937
    %v1138 = vadd.f32 %v1136, %v1137
    %1140 = vrot.lane.b32.xlu0 %v1138, 96
    %v1141 = vpop.permute.xlu0 %1140
    %v1143 = vsel %vm151, %v1141, %v1112
    %v1145 = vsel %vm181, %v1143, 0
    %1147 = vmatprep.subr.mxu0 %v300
    %1148 = vmatpush1.msra.mxu0 %v299
    %1149 = vmatprep.subr.mxu0 %v303
    %1150 = vmatpush1.msra.mxu0 %v302
    %1151 = vmatprep.subr.mxu0 %v306
    %1152 = vmatpush1.msra.mxu0 %v305
    %1153 = vmatprep.subr.mxu0 %v309
    %1154 = vmatpush1.msra.mxu0 %v308
    %1155 = vmatprep.subr.mxu0 %v312
    %1156 = vmatpush1.msra.mxu0 %v311
    %1157 = vmatprep.subr.mxu0 %v315
    %1158 = vmatpush1.msra.mxu0 %v314
    %1159 = vmatprep.subr.mxu0 %v318
    %1160 = vmatpush1.msra.mxu0 %v317
    %1161 = vmatprep.subr.mxu0 %v321
    %1162 = vmatpush1.msra.mxu0 %v320
    %1163 = vmatprep.subr.mxu0 0.0
    %1164 = vmatpush1.msra.mxu0 0.0
    %1165 = vmatprep.subr.mxu0 0.0
    %1166 = vmatpush1.msra.mxu0 0.0
    %1167 = vmatprep.subr.mxu0 0.0
    %1168 = vmatpush1.msra.mxu0 0.0
    %1169 = vmatprep.subr.mxu0 0.0
    %1170 = vmatpush1.msra.mxu0 0.0
    %1171 = vmatprep.subr.mxu0 0.0
    %1172 = vmatpush1.msra.mxu0 0.0
    %1173 = vmatprep.subr.mxu0 0.0
    %1174 = vmatpush1.msra.mxu0 0.0
    %1175 = vmatprep.subr.mxu0 0.0
    %1176 = vmatpush1.msra.mxu0 0.0
    %1177 = vmatprep.subr.mxu0 0.0
    %1178 = vmatpush1.msra.mxu0 0.0
    %1179 = vmatprep.subr.mxu0 0.0
    %1180 = vmatpush1.msra.mxu0 0.0
    %1181 = vmatprep.subr.mxu0 0.0
    %1182 = vmatpush1.msra.mxu0 0.0
    %1183 = vmatprep.subr.mxu0 0.0
    %1184 = vmatpush1.msra.mxu0 0.0
    %1185 = vmatprep.subr.mxu0 0.0
    %1186 = vmatpush1.msra.mxu0 0.0
    %1187 = vmatprep.subr.mxu0 0.0
    %1188 = vmatpush1.msra.mxu0 0.0
    %1189 = vmatprep.subr.mxu0 0.0
    %1190 = vmatpush1.msra.mxu0 0.0
    %1191 = vmatprep.subr.mxu0 0.0
    %1192 = vmatpush1.msra.mxu0 0.0
    %1193 = vmatprep.subr.mxu0 0.0
    %1194 = vmatpush1.msra.mxu0 0.0
    %1195 = vmatprep.subr.mxu0 0.0
    %1196 = vmatpush1.msra.mxu0 0.0
    %1197 = vmatprep.subr.mxu0 0.0
    %1198 = vmatpush1.msra.mxu0 0.0
    %1199 = vmatprep.subr.mxu0 0.0
    %1200 = vmatpush1.msra.mxu0 0.0
    %1201 = vmatprep.subr.mxu0 0.0
    %1202 = vmatpush1.msra.mxu0 0.0
    %1203 = vmatprep.subr.mxu0 0.0
    %1204 = vmatpush1.msra.mxu0 0.0
    %1205 = vmatprep.subr.mxu0 0.0
    %1206 = vmatpush1.msra.mxu0 0.0
    %1207 = vmatprep.subr.mxu0 0.0
    %1208 = vmatpush1.msra.mxu0 0.0
    %1209 = vmatprep.subr.mxu0 0.0
    %1210 = vmatpush1.msra.mxu0 0.0
    %1211 = vmatprep.mubr.f32.mxu0 0.0
    %1212 = vmatmul.mubr.f32.gmra.mrb[0].mxu0 %v1145
    %v1213 = vpop.f32.mrb[0].mxu0
    %v1214 = vadd.f32 %v328, %v1213
    %v1215 = vpop.f32.mrb[0].mxu0
    %v1216 = vadd.f32 %v332, %v1215
    %1217 = vdwg.mxu0
    %1218 = vmatprep.subr.mxu0 0.0
    %1219 = vmatpush1.msra.mxu0 %v301
    %1220 = vmatprep.subr.mxu0 0.0
    %1221 = vmatpush1.msra.mxu0 %v304
    %1222 = vmatprep.subr.mxu0 0.0
    %1223 = vmatpush1.msra.mxu0 %v307
    %1224 = vmatprep.subr.mxu0 0.0
    %1225 = vmatpush1.msra.mxu0 %v310
    %1226 = vmatprep.subr.mxu0 0.0
    %1227 = vmatpush1.msra.mxu0 %v313
    %1228 = vmatprep.subr.mxu0 0.0
    %1229 = vmatpush1.msra.mxu0 %v316
    %1230 = vmatprep.subr.mxu0 0.0
    %1231 = vmatpush1.msra.mxu0 %v319
    %1232 = vmatprep.subr.mxu0 0.0
    %1233 = vmatpush1.msra.mxu0 %v322
    %1234 = vmatprep.subr.mxu0 0.0
    %1235 = vmatpush1.msra.mxu0 0.0
    %1236 = vmatprep.subr.mxu0 0.0
    %1237 = vmatpush1.msra.mxu0 0.0
    %1238 = vmatprep.subr.mxu0 0.0
    %1239 = vmatpush1.msra.mxu0 0.0
    %1240 = vmatprep.subr.mxu0 0.0
    %1241 = vmatpush1.msra.mxu0 0.0
    %1242 = vmatprep.subr.mxu0 0.0
    %1243 = vmatpush1.msra.mxu0 0.0
    %1244 = vmatprep.subr.mxu0 0.0
    %1245 = vmatpush1.msra.mxu0 0.0
    %1246 = vmatprep.subr.mxu0 0.0
    %1247 = vmatpush1.msra.mxu0 0.0
    %1248 = vmatprep.subr.mxu0 0.0
    %1249 = vmatpush1.msra.mxu0 0.0
    %1250 = vmatprep.subr.mxu0 0.0
    %1251 = vmatpush1.msra.mxu0 0.0
    %1252 = vmatprep.subr.mxu0 0.0
    %1253 = vmatpush1.msra.mxu0 0.0
    %1254 = vmatprep.subr.mxu0 0.0
    %1255 = vmatpush1.msra.mxu0 0.0
    %1256 = vmatprep.subr.mxu0 0.0
    %1257 = vmatpush1.msra.mxu0 0.0
    %1258 = vmatprep.subr.mxu0 0.0
    %1259 = vmatpush1.msra.mxu0 0.0
    %1260 = vmatprep.subr.mxu0 0.0
    %1261 = vmatpush1.msra.mxu0 0.0
    %1262 = vmatprep.subr.mxu0 0.0
    %1263 = vmatpush1.msra.mxu0 0.0
    %1264 = vmatprep.subr.mxu0 0.0
    %1265 = vmatpush1.msra.mxu0 0.0
    %1266 = vmatprep.subr.mxu0 0.0
    %1267 = vmatpush1.msra.mxu0 0.0
    %1268 = vmatprep.subr.mxu0 0.0
    %1269 = vmatpush1.msra.mxu0 0.0
    %1270 = vmatprep.subr.mxu0 0.0
    %1271 = vmatpush1.msra.mxu0 0.0
    %1272 = vmatprep.subr.mxu0 0.0
    %1273 = vmatpush1.msra.mxu0 0.0
    %1274 = vmatprep.subr.mxu0 0.0
    %1275 = vmatpush1.msra.mxu0 0.0
    %1276 = vmatprep.subr.mxu0 0.0
    %1277 = vmatpush1.msra.mxu0 0.0
    %1278 = vmatprep.subr.mxu0 0.0
    %1279 = vmatpush1.msra.mxu0 0.0
    %1280 = vmatprep.subr.mxu0 0.0
    %1281 = vmatpush1.msra.mxu0 0.0
    %1282 = vmatprep.mubr.f32.mxu0 0.0
    %1283 = vmatmul.mubr.f32.gmra.mrb[0].mxu0 %v1145
    %v1284 = vpop.f32.mrb[0].mxu0
    %v1285 = vadd.f32 %v336, %v1284
    %v1286 = vpop.f32.mrb[0].mxu0
    %1287 = vdwg.mxu0
    %v1288 = vadd.f32 %v1214, %v1285
    %v1289 = vxor.u32 %v1288, 2147483648
    %v1290 = vmul.f32 %v1289, 1.442695
    %v1291 = vpow.pop %v1290
    %v1292 = vadd.f32 %v1291, 1.0
    %v1293 = vrcp.pop %v1292
    %v1294 = vmul.f32 1.0, %v1293
    %1296 = vrot.lane.b32.xlu0 %v1285, 64
    %v1297 = vpop.permute.xlu0 %1296
    %v1299 = vmul.f32 %v1294, %v1297
    %1301 = vrot.lane.b32.xlu0 %v1299, 64
    %v1302 = vpop.permute.xlu0 %1301
    %v1304 = vadd.f32 %v1214, %v1302
    %v1305 = vtanh.pop %v1304
    %v1306 = vsub.f32 1.0, %v1294
    %1308 = vrot.lane.b32.xlu0 %v1305, 96
    %v1309 = vpop.permute.xlu0 %1308
    %v1311 = vmul.f32 %v1306, %v1309
    %v1312 = vmul.f32 %v1294, %v1112
    %v1313 = vadd.f32 %v1311, %v1312
    %v1314 = vadd.f32 %v261, %v1216
    %v1315 = vxor.u32 %v1314, 2147483648
    %v1316 = vmul.f32 %v1315, 1.442695
    %v1317 = vpow.pop %v1316
    %v1318 = vadd.f32 %v1317, 1.0
    %v1319 = vrcp.pop %v1318
    %v1320 = vmul.f32 1.0, %v1319
    %1322 = vrot.lane.b32.xlu0 %v1216, 64
    %v1323 = vpop.permute.xlu0 %1322
    %v1325 = vmul.f32 %v1320, %v1323
    %1327 = vrot.lane.b32.xlu0 %v1325, 64
    %v1328 = vpop.permute.xlu0 %1327
    %v1330 = vadd.f32 %v261, %v1328
    %v1331 = vtanh.pop %v1330
    %v1332 = vsub.f32 1.0, %v1320
    %1334 = vrot.lane.b32.xlu0 %v1331, 96
    %v1335 = vpop.permute.xlu0 %1334
    %v1337 = vmul.f32 %v1332, %v1335
    %v1338 = vmul.f32 %v1320, %v1138
    %v1339 = vadd.f32 %v1337, %v1338
    %1341 = vrot.lane.b32.xlu0 %v1339, 96
    %v1342 = vpop.permute.xlu0 %1341
    %v1344 = vsel %vm151, %v1342, %v1313
    %v1346 = vsel %vm181, %v1344, 0
    %1348 = vmatprep.subr.mxu0 %v300
    %1349 = vmatpush1.msra.mxu0 %v299
    %1350 = vmatprep.subr.mxu0 %v303
    %1351 = vmatpush1.msra.mxu0 %v302
    %1352 = vmatprep.subr.mxu0 %v306
    %1353 = vmatpush1.msra.mxu0 %v305
    %1354 = vmatprep.subr.mxu0 %v309
    %1355 = vmatpush1.msra.mxu0 %v308
    %1356 = vmatprep.subr.mxu0 %v312
    %1357 = vmatpush1.msra.mxu0 %v311
    %1358 = vmatprep.subr.mxu0 %v315
    %1359 = vmatpush1.msra.mxu0 %v314
    %1360 = vmatprep.subr.mxu0 %v318
    %1361 = vmatpush1.msra.mxu0 %v317
    %1362 = vmatprep.subr.mxu0 %v321
    %1363 = vmatpush1.msra.mxu0 %v320
    %1364 = vmatprep.subr.mxu0 0.0
    %1365 = vmatpush1.msra.mxu0 0.0
    %1366 = vmatprep.subr.mxu0 0.0
    %1367 = vmatpush1.msra.mxu0 0.0
    %1368 = vmatprep.subr.mxu0 0.0
    %1369 = vmatpush1.msra.mxu0 0.0
    %1370 = vmatprep.subr.mxu0 0.0
    %1371 = vmatpush1.msra.mxu0 0.0
    %1372 = vmatprep.subr.mxu0 0.0
    %1373 = vmatpush1.msra.mxu0 0.0
    %1374 = vmatprep.subr.mxu0 0.0
    %1375 = vmatpush1.msra.mxu0 0.0
    %1376 = vmatprep.subr.mxu0 0.0
    %1377 = vmatpush1.msra.mxu0 0.0
    %1378 = vmatprep.subr.mxu0 0.0
    %1379 = vmatpush1.msra.mxu0 0.0
    %1380 = vmatprep.subr.mxu0 0.0
    %1381 = vmatpush1.msra.mxu0 0.0
    %1382 = vmatprep.subr.mxu0 0.0
    %1383 = vmatpush1.msra.mxu0 0.0
    %1384 = vmatprep.subr.mxu0 0.0
    %1385 = vmatpush1.msra.mxu0 0.0
    %1386 = vmatprep.subr.mxu0 0.0
    %1387 = vmatpush1.msra.mxu0 0.0
    %1388 = vmatprep.subr.mxu0 0.0
    %1389 = vmatpush1.msra.mxu0 0.0
    %1390 = vmatprep.subr.mxu0 0.0
    %1391 = vmatpush1.msra.mxu0 0.0
    %1392 = vmatprep.subr.mxu0 0.0
    %1393 = vmatpush1.msra.mxu0 0.0
    %1394 = vmatprep.subr.mxu0 0.0
    %1395 = vmatpush1.msra.mxu0 0.0
    %1396 = vmatprep.subr.mxu0 0.0
    %1397 = vmatpush1.msra.mxu0 0.0
    %1398 = vmatprep.subr.mxu0 0.0
    %1399 = vmatpush1.msra.mxu0 0.0
    %1400 = vmatprep.subr.mxu0 0.0
    %1401 = vmatpush1.msra.mxu0 0.0
    %1402 = vmatprep.subr.mxu0 0.0
    %1403 = vmatpush1.msra.mxu0 0.0
    %1404 = vmatprep.subr.mxu0 0.0
    %1405 = vmatpush1.msra.mxu0 0.0
    %1406 = vmatprep.subr.mxu0 0.0
    %1407 = vmatpush1.msra.mxu0 0.0
    %1408 = vmatprep.subr.mxu0 0.0
    %1409 = vmatpush1.msra.mxu0 0.0
    %1410 = vmatprep.subr.mxu0 0.0
    %1411 = vmatpush1.msra.mxu0 0.0
    %1412 = vmatprep.mubr.f32.mxu0 0.0
    %1413 = vmatmul.mubr.f32.gmra.mrb[0].mxu0 %v1346
    %v1414 = vpop.f32.mrb[0].mxu0
    %v1415 = vadd.f32 %v328, %v1414
    %v1416 = vpop.f32.mrb[0].mxu0
    %v1417 = vadd.f32 %v332, %v1416
    %1418 = vdwg.mxu0
    %1419 = vmatprep.subr.mxu0 0.0
    %1420 = vmatpush1.msra.mxu0 %v301
    %1421 = vmatprep.subr.mxu0 0.0
    %1422 = vmatpush1.msra.mxu0 %v304
    %1423 = vmatprep.subr.mxu0 0.0
    %1424 = vmatpush1.msra.mxu0 %v307
    %1425 = vmatprep.subr.mxu0 0.0
    %1426 = vmatpush1.msra.mxu0 %v310
    %1427 = vmatprep.subr.mxu0 0.0
    %1428 = vmatpush1.msra.mxu0 %v313
    %1429 = vmatprep.subr.mxu0 0.0
    %1430 = vmatpush1.msra.mxu0 %v316
    %1431 = vmatprep.subr.mxu0 0.0
    %1432 = vmatpush1.msra.mxu0 %v319
    %1433 = vmatprep.subr.mxu0 0.0
    %1434 = vmatpush1.msra.mxu0 %v322
    %1435 = vmatprep.subr.mxu0 0.0
    %1436 = vmatpush1.msra.mxu0 0.0
    %1437 = vmatprep.subr.mxu0 0.0
    %1438 = vmatpush1.msra.mxu0 0.0
    %1439 = vmatprep.subr.mxu0 0.0
    %1440 = vmatpush1.msra.mxu0 0.0
    %1441 = vmatprep.subr.mxu0 0.0
    %1442 = vmatpush1.msra.mxu0 0.0
    %1443 = vmatprep.subr.mxu0 0.0
    %1444 = vmatpush1.msra.mxu0 0.0
    %1445 = vmatprep.subr.mxu0 0.0
    %1446 = vmatpush1.msra.mxu0 0.0
    %1447 = vmatprep.subr.mxu0 0.0
    %1448 = vmatpush1.msra.mxu0 0.0
    %1449 = vmatprep.subr.mxu0 0.0
    %1450 = vmatpush1.msra.mxu0 0.0
    %1451 = vmatprep.subr.mxu0 0.0
    %1452 = vmatpush1.msra.mxu0 0.0
    %1453 = vmatprep.subr.mxu0 0.0
    %1454 = vmatpush1.msra.mxu0 0.0
    %1455 = vmatprep.subr.mxu0 0.0
    %1456 = vmatpush1.msra.mxu0 0.0
    %1457 = vmatprep.subr.mxu0 0.0
    %1458 = vmatpush1.msra.mxu0 0.0
    %1459 = vmatprep.subr.mxu0 0.0
    %1460 = vmatpush1.msra.mxu0 0.0
    %1461 = vmatprep.subr.mxu0 0.0
    %1462 = vmatpush1.msra.mxu0 0.0
    %1463 = vmatprep.subr.mxu0 0.0
    %1464 = vmatpush1.msra.mxu0 0.0
    %1465 = vmatprep.subr.mxu0 0.0
    %1466 = vmatpush1.msra.mxu0 0.0
    %1467 = vmatprep.subr.mxu0 0.0
    %1468 = vmatpush1.msra.mxu0 0.0
    %1469 = vmatprep.subr.mxu0 0.0
    %1470 = vmatpush1.msra.mxu0 0.0
    %1471 = vmatprep.subr.mxu0 0.0
    %1472 = vmatpush1.msra.mxu0 0.0
    %1473 = vmatprep.subr.mxu0 0.0
    %1474 = vmatpush1.msra.mxu0 0.0
    %1475 = vmatprep.subr.mxu0 0.0
    %1476 = vmatpush1.msra.mxu0 0.0
    %1477 = vmatprep.subr.mxu0 0.0
    %1478 = vmatpush1.msra.mxu0 0.0
    %1479 = vmatprep.subr.mxu0 0.0
    %1480 = vmatpush1.msra.mxu0 0.0
    %1481 = vmatprep.subr.mxu0 0.0
    %1482 = vmatpush1.msra.mxu0 0.0
    %1483 = vmatprep.mubr.f32.mxu0 0.0
    %1484 = vmatmul.mubr.f32.gmra.mrb[0].mxu0 %v1346
    %v1485 = vpop.f32.mrb[0].mxu0
    %v1486 = vadd.f32 %v336, %v1485
    %v1487 = vpop.f32.mrb[0].mxu0
    %1488 = vdwg.mxu0
    %v1489 = vadd.f32 %v1415, %v1486
    %v1490 = vxor.u32 %v1489, 2147483648
    %v1491 = vmul.f32 %v1490, 1.442695
    %v1492 = vpow.pop %v1491
    %v1493 = vadd.f32 %v1492, 1.0
    %v1494 = vrcp.pop %v1493
    %v1495 = vmul.f32 1.0, %v1494
    %1497 = vrot.lane.b32.xlu0 %v1486, 64
    %v1498 = vpop.permute.xlu0 %1497
    %v1500 = vmul.f32 %v1495, %v1498
    %1502 = vrot.lane.b32.xlu0 %v1500, 64
    %v1503 = vpop.permute.xlu0 %1502
    %v1505 = vadd.f32 %v1415, %v1503
    %v1506 = vtanh.pop %v1505
    %v1507 = vsub.f32 1.0, %v1495
    %1509 = vrot.lane.b32.xlu0 %v1506, 96
    %v1510 = vpop.permute.xlu0 %1509
    %v1512 = vmul.f32 %v1507, %v1510
    %v1513 = vmul.f32 %v1495, %v1313
    %v1514 = vadd.f32 %v1512, %v1513
    %v1515 = vadd.f32 %v262, %v1417
    %v1516 = vxor.u32 %v1515, 2147483648
    %v1517 = vmul.f32 %v1516, 1.442695
    %v1518 = vpow.pop %v1517
    %v1519 = vadd.f32 %v1518, 1.0
    %v1520 = vrcp.pop %v1519
    %v1521 = vmul.f32 1.0, %v1520
    %1523 = vrot.lane.b32.xlu0 %v1417, 64
    %v1524 = vpop.permute.xlu0 %1523
    %v1526 = vmul.f32 %v1521, %v1524
    %1528 = vrot.lane.b32.xlu0 %v1526, 64
    %v1529 = vpop.permute.xlu0 %1528
    %v1531 = vadd.f32 %v262, %v1529
    %v1532 = vtanh.pop %v1531
    %v1533 = vsub.f32 1.0, %v1521
    %1535 = vrot.lane.b32.xlu0 %v1532, 96
    %v1536 = vpop.permute.xlu0 %1535
    %v1538 = vmul.f32 %v1533, %v1536
    %v1539 = vmul.f32 %v1521, %v1339
    %v1540 = vadd.f32 %v1538, %v1539
    %1542 = vrot.lane.b32.xlu0 %v1540, 96
    %v1543 = vpop.permute.xlu0 %1542
    %v1545 = vsel %vm151, %v1543, %v1514
    %v1547 = vsel %vm181, %v1545, 0
    %1549 = vmatprep.subr.mxu0 %v300
    %1550 = vmatpush1.msra.mxu0 %v299
    %1551 = vmatprep.subr.mxu0 %v303
    %1552 = vmatpush1.msra.mxu0 %v302
    %1553 = vmatprep.subr.mxu0 %v306
    %1554 = vmatpush1.msra.mxu0 %v305
    %1555 = vmatprep.subr.mxu0 %v309
    %1556 = vmatpush1.msra.mxu0 %v308
    %1557 = vmatprep.subr.mxu0 %v312
    %1558 = vmatpush1.msra.mxu0 %v311
    %1559 = vmatprep.subr.mxu0 %v315
    %1560 = vmatpush1.msra.mxu0 %v314
    %1561 = vmatprep.subr.mxu0 %v318
    %1562 = vmatpush1.msra.mxu0 %v317
    %1563 = vmatprep.subr.mxu0 %v321
    %1564 = vmatpush1.msra.mxu0 %v320
    %1565 = vmatprep.subr.mxu0 0.0
    %1566 = vmatpush1.msra.mxu0 0.0
    %1567 = vmatprep.subr.mxu0 0.0
    %1568 = vmatpush1.msra.mxu0 0.0
    %1569 = vmatprep.subr.mxu0 0.0
    %1570 = vmatpush1.msra.mxu0 0.0
    %1571 = vmatprep.subr.mxu0 0.0
    %1572 = vmatpush1.msra.mxu0 0.0
    %1573 = vmatprep.subr.mxu0 0.0
    %1574 = vmatpush1.msra.mxu0 0.0
    %1575 = vmatprep.subr.mxu0 0.0
    %1576 = vmatpush1.msra.mxu0 0.0
    %1577 = vmatprep.subr.mxu0 0.0
    %1578 = vmatpush1.msra.mxu0 0.0
    %1579 = vmatprep.subr.mxu0 0.0
    %1580 = vmatpush1.msra.mxu0 0.0
    %1581 = vmatprep.subr.mxu0 0.0
    %1582 = vmatpush1.msra.mxu0 0.0
    %1583 = vmatprep.subr.mxu0 0.0
    %1584 = vmatpush1.msra.mxu0 0.0
    %1585 = vmatprep.subr.mxu0 0.0
    %1586 = vmatpush1.msra.mxu0 0.0
    %1587 = vmatprep.subr.mxu0 0.0
    %1588 = vmatpush1.msra.mxu0 0.0
    %1589 = vmatprep.subr.mxu0 0.0
    %1590 = vmatpush1.msra.mxu0 0.0
    %1591 = vmatprep.subr.mxu0 0.0
    %1592 = vmatpush1.msra.mxu0 0.0
    %1593 = vmatprep.subr.mxu0 0.0
    %1594 = vmatpush1.msra.mxu0 0.0
    %1595 = vmatprep.subr.mxu0 0.0
    %1596 = vmatpush1.msra.mxu0 0.0
    %1597 = vmatprep.subr.mxu0 0.0
    %1598 = vmatpush1.msra.mxu0 0.0
    %1599 = vmatprep.subr.mxu0 0.0
    %1600 = vmatpush1.msra.mxu0 0.0
    %1601 = vmatprep.subr.mxu0 0.0
    %1602 = vmatpush1.msra.mxu0 0.0
    %1603 = vmatprep.subr.mxu0 0.0
    %1604 = vmatpush1.msra.mxu0 0.0
    %1605 = vmatprep.subr.mxu0 0.0
    %1606 = vmatpush1.msra.mxu0 0.0
    %1607 = vmatprep.subr.mxu0 0.0
    %1608 = vmatpush1.msra.mxu0 0.0
    %1609 = vmatprep.subr.mxu0 0.0
    %1610 = vmatpush1.msra.mxu0 0.0
    %1611 = vmatprep.subr.mxu0 0.0
    %1612 = vmatpush1.msra.mxu0 0.0
    %1613 = vmatprep.mubr.f32.mxu0 0.0
    %1614 = vmatmul.mubr.f32.gmra.mrb[0].mxu0 %v1547
    %v1615 = vpop.f32.mrb[0].mxu0
    %v1616 = vadd.f32 %v328, %v1615
    %v1617 = vpop.f32.mrb[0].mxu0
    %v1618 = vadd.f32 %v332, %v1617
    %1619 = vdwg.mxu0
    %1620 = vmatprep.subr.mxu0 0.0
    %1621 = vmatpush1.msra.mxu0 %v301
    %1622 = vmatprep.subr.mxu0 0.0
    %1623 = vmatpush1.msra.mxu0 %v304
    %1624 = vmatprep.subr.mxu0 0.0
    %1625 = vmatpush1.msra.mxu0 %v307
    %1626 = vmatprep.subr.mxu0 0.0
    %1627 = vmatpush1.msra.mxu0 %v310
    %1628 = vmatprep.subr.mxu0 0.0
    %1629 = vmatpush1.msra.mxu0 %v313
    %1630 = vmatprep.subr.mxu0 0.0
    %1631 = vmatpush1.msra.mxu0 %v316
    %1632 = vmatprep.subr.mxu0 0.0
    %1633 = vmatpush1.msra.mxu0 %v319
    %1634 = vmatprep.subr.mxu0 0.0
    %1635 = vmatpush1.msra.mxu0 %v322
    %1636 = vmatprep.subr.mxu0 0.0
    %1637 = vmatpush1.msra.mxu0 0.0
    %1638 = vmatprep.subr.mxu0 0.0
    %1639 = vmatpush1.msra.mxu0 0.0
    %1640 = vmatprep.subr.mxu0 0.0
    %1641 = vmatpush1.msra.mxu0 0.0
    %1642 = vmatprep.subr.mxu0 0.0
    %1643 = vmatpush1.msra.mxu0 0.0
    %1644 = vmatprep.subr.mxu0 0.0
    %1645 = vmatpush1.msra.mxu0 0.0
    %1646 = vmatprep.subr.mxu0 0.0
    %1647 = vmatpush1.msra.mxu0 0.0
    %1648 = vmatprep.subr.mxu0 0.0
    %1649 = vmatpush1.msra.mxu0 0.0
    %1650 = vmatprep.subr.mxu0 0.0
    %1651 = vmatpush1.msra.mxu0 0.0
    %1652 = vmatprep.subr.mxu0 0.0
    %1653 = vmatpush1.msra.mxu0 0.0
    %1654 = vmatprep.subr.mxu0 0.0
    %1655 = vmatpush1.msra.mxu0 0.0
    %1656 = vmatprep.subr.mxu0 0.0
    %1657 = vmatpush1.msra.mxu0 0.0
    %1658 = vmatprep.subr.mxu0 0.0
    %1659 = vmatpush1.msra.mxu0 0.0
    %1660 = vmatprep.subr.mxu0 0.0
    %1661 = vmatpush1.msra.mxu0 0.0
    %1662 = vmatprep.subr.mxu0 0.0
    %1663 = vmatpush1.msra.mxu0 0.0
    %1664 = vmatprep.subr.mxu0 0.0
    %1665 = vmatpush1.msra.mxu0 0.0
    %1666 = vmatprep.subr.mxu0 0.0
    %1667 = vmatpush1.msra.mxu0 0.0
    %1668 = vmatprep.subr.mxu0 0.0
    %1669 = vmatpush1.msra.mxu0 0.0
    %1670 = vmatprep.subr.mxu0 0.0
    %1671 = vmatpush1.msra.mxu0 0.0
    %1672 = vmatprep.subr.mxu0 0.0
    %1673 = vmatpush1.msra.mxu0 0.0
    %1674 = vmatprep.subr.mxu0 0.0
    %1675 = vmatpush1.msra.mxu0 0.0
    %1676 = vmatprep.subr.mxu0 0.0
    %1677 = vmatpush1.msra.mxu0 0.0
    %1678 = vmatprep.subr.mxu0 0.0
    %1679 = vmatpush1.msra.mxu0 0.0
    %1680 = vmatprep.subr.mxu0 0.0
    %1681 = vmatpush1.msra.mxu0 0.0
    %1682 = vmatprep.subr.mxu0 0.0
    %1683 = vmatpush1.msra.mxu0 0.0
    %1684 = vmatprep.mubr.f32.mxu0 0.0
    %1685 = vmatmul.mubr.f32.gmra.mrb[0].mxu0 %v1547
    %v1686 = vpop.f32.mrb[0].mxu0
    %v1687 = vadd.f32 %v336, %v1686
    %v1688 = vpop.f32.mrb[0].mxu0
    %1689 = vdwg.mxu0
    %v1690 = vadd.f32 %v1616, %v1687
    %v1691 = vxor.u32 %v1690, 2147483648
    %v1692 = vmul.f32 %v1691, 1.442695
    %v1693 = vpow.pop %v1692
    %v1694 = vadd.f32 %v1693, 1.0
    %v1695 = vrcp.pop %v1694
    %v1696 = vmul.f32 1.0, %v1695
    %1698 = vrot.lane.b32.xlu0 %v1687, 64
    %v1699 = vpop.permute.xlu0 %1698
    %v1701 = vmul.f32 %v1696, %v1699
    %1703 = vrot.lane.b32.xlu0 %v1701, 64
    %v1704 = vpop.permute.xlu0 %1703
    %v1706 = vadd.f32 %v1616, %v1704
    %v1707 = vtanh.pop %v1706
    %v1708 = vsub.f32 1.0, %v1696
    %1710 = vrot.lane.b32.xlu0 %v1707, 96
    %v1711 = vpop.permute.xlu0 %1710
    %v1713 = vmul.f32 %v1708, %v1711
    %v1714 = vmul.f32 %v1696, %v1514
    %v1715 = vadd.f32 %v1713, %v1714
    %v1716 = vadd.f32 %v263, %v1618
    %v1717 = vxor.u32 %v1716, 2147483648
    %v1718 = vmul.f32 %v1717, 1.442695
    %v1719 = vpow.pop %v1718
    %v1720 = vadd.f32 %v1719, 1.0
    %v1721 = vrcp.pop %v1720
    %v1722 = vmul.f32 1.0, %v1721
    %1724 = vrot.lane.b32.xlu0 %v1618, 64
    %v1725 = vpop.permute.xlu0 %1724
    %v1727 = vmul.f32 %v1722, %v1725
    %1729 = vrot.lane.b32.xlu0 %v1727, 64
    %v1730 = vpop.permute.xlu0 %1729
    %v1732 = vadd.f32 %v263, %v1730
    %v1733 = vtanh.pop %v1732
    %v1734 = vsub.f32 1.0, %v1722
    %1736 = vrot.lane.b32.xlu0 %v1733, 96
    %v1737 = vpop.permute.xlu0 %1736
    %v1739 = vmul.f32 %v1734, %v1737
    %v1740 = vmul.f32 %v1722, %v1540
    %v1741 = vadd.f32 %v1739, %v1740
    %1743 = vrot.lane.b32.xlu0 %v1741, 96
    %v1744 = vpop.permute.xlu0 %1743
    %v1746 = vsel %vm151, %v1744, %v1715
    %v1748 = vsel %vm181, %v1746, 0
    %1750 = vmatprep.subr.mxu0 %v300
    %1751 = vmatpush1.msra.mxu0 %v299
    %1752 = vmatprep.subr.mxu0 %v303
    %1753 = vmatpush1.msra.mxu0 %v302
    %1754 = vmatprep.subr.mxu0 %v306
    %1755 = vmatpush1.msra.mxu0 %v305
    %1756 = vmatprep.subr.mxu0 %v309
    %1757 = vmatpush1.msra.mxu0 %v308
    %1758 = vmatprep.subr.mxu0 %v312
    %1759 = vmatpush1.msra.mxu0 %v311
    %1760 = vmatprep.subr.mxu0 %v315
    %1761 = vmatpush1.msra.mxu0 %v314
    %1762 = vmatprep.subr.mxu0 %v318
    %1763 = vmatpush1.msra.mxu0 %v317
    %1764 = vmatprep.subr.mxu0 %v321
    %1765 = vmatpush1.msra.mxu0 %v320
    %1766 = vmatprep.subr.mxu0 0.0
    %1767 = vmatpush1.msra.mxu0 0.0
    %1768 = vmatprep.subr.mxu0 0.0
    %1769 = vmatpush1.msra.mxu0 0.0
    %1770 = vmatprep.subr.mxu0 0.0
    %1771 = vmatpush1.msra.mxu0 0.0
    %1772 = vmatprep.subr.mxu0 0.0
    %1773 = vmatpush1.msra.mxu0 0.0
    %1774 = vmatprep.subr.mxu0 0.0
    %1775 = vmatpush1.msra.mxu0 0.0
    %1776 = vmatprep.subr.mxu0 0.0
    %1777 = vmatpush1.msra.mxu0 0.0
    %1778 = vmatprep.subr.mxu0 0.0
    %1779 = vmatpush1.msra.mxu0 0.0
    %1780 = vmatprep.subr.mxu0 0.0
    %1781 = vmatpush1.msra.mxu0 0.0
    %1782 = vmatprep.subr.mxu0 0.0
    %1783 = vmatpush1.msra.mxu0 0.0
    %1784 = vmatprep.subr.mxu0 0.0
    %1785 = vmatpush1.msra.mxu0 0.0
    %1786 = vmatprep.subr.mxu0 0.0
    %1787 = vmatpush1.msra.mxu0 0.0
    %1788 = vmatprep.subr.mxu0 0.0
    %1789 = vmatpush1.msra.mxu0 0.0
    %1790 = vmatprep.subr.mxu0 0.0
    %1791 = vmatpush1.msra.mxu0 0.0
    %1792 = vmatprep.subr.mxu0 0.0
    %1793 = vmatpush1.msra.mxu0 0.0
    %1794 = vmatprep.subr.mxu0 0.0
    %1795 = vmatpush1.msra.mxu0 0.0
    %1796 = vmatprep.subr.mxu0 0.0
    %1797 = vmatpush1.msra.mxu0 0.0
    %1798 = vmatprep.subr.mxu0 0.0
    %1799 = vmatpush1.msra.mxu0 0.0
    %1800 = vmatprep.subr.mxu0 0.0
    %1801 = vmatpush1.msra.mxu0 0.0
    %1802 = vmatprep.subr.mxu0 0.0
    %1803 = vmatpush1.msra.mxu0 0.0
    %1804 = vmatprep.subr.mxu0 0.0
    %1805 = vmatpush1.msra.mxu0 0.0
    %1806 = vmatprep.subr.mxu0 0.0
    %1807 = vmatpush1.msra.mxu0 0.0
    %1808 = vmatprep.subr.mxu0 0.0
    %1809 = vmatpush1.msra.mxu0 0.0
    %1810 = vmatprep.subr.mxu0 0.0
    %1811 = vmatpush1.msra.mxu0 0.0
    %1812 = vmatprep.subr.mxu0 0.0
    %1813 = vmatpush1.msra.mxu0 0.0
    %1814 = vmatprep.mubr.f32.mxu0 0.0
    %1815 = vmatmul.mubr.f32.gmra.mrb[0].mxu0 %v1748
    %v1816 = vpop.f32.mrb[0].mxu0
    %v1817 = vadd.f32 %v328, %v1816
    %v1818 = vpop.f32.mrb[0].mxu0
    %1819 = vdwg.mxu0
    %1820 = vmatprep.subr.mxu0 0.0
    %1821 = vmatpush1.msra.mxu0 %v301
    %1822 = vmatprep.subr.mxu0 0.0
    %1823 = vmatpush1.msra.mxu0 %v304
    %1824 = vmatprep.subr.mxu0 0.0
    %1825 = vmatpush1.msra.mxu0 %v307
    %1826 = vmatprep.subr.mxu0 0.0
    %1827 = vmatpush1.msra.mxu0 %v310
    %1828 = vmatprep.subr.mxu0 0.0
    %1829 = vmatpush1.msra.mxu0 %v313
    %1830 = vmatprep.subr.mxu0 0.0
    %1831 = vmatpush1.msra.mxu0 %v316
    %1832 = vmatprep.subr.mxu0 0.0
    %1833 = vmatpush1.msra.mxu0 %v319
    %1834 = vmatprep.subr.mxu0 0.0
    %1835 = vmatpush1.msra.mxu0 %v322
    %1836 = vmatprep.subr.mxu0 0.0
    %1837 = vmatpush1.msra.mxu0 0.0
    %1838 = vmatprep.subr.mxu0 0.0
    %1839 = vmatpush1.msra.mxu0 0.0
    %1840 = vmatprep.subr.mxu0 0.0
    %1841 = vmatpush1.msra.mxu0 0.0
    %1842 = vmatprep.subr.mxu0 0.0
    %1843 = vmatpush1.msra.mxu0 0.0
    %1844 = vmatprep.subr.mxu0 0.0
    %1845 = vmatpush1.msra.mxu0 0.0
    %1846 = vmatprep.subr.mxu0 0.0
    %1847 = vmatpush1.msra.mxu0 0.0
    %1848 = vmatprep.subr.mxu0 0.0
    %1849 = vmatpush1.msra.mxu0 0.0
    %1850 = vmatprep.subr.mxu0 0.0
    %1851 = vmatpush1.msra.mxu0 0.0
    %1852 = vmatprep.subr.mxu0 0.0
    %1853 = vmatpush1.msra.mxu0 0.0
    %1854 = vmatprep.subr.mxu0 0.0
    %1855 = vmatpush1.msra.mxu0 0.0
    %1856 = vmatprep.subr.mxu0 0.0
    %1857 = vmatpush1.msra.mxu0 0.0
    %1858 = vmatprep.subr.mxu0 0.0
    %1859 = vmatpush1.msra.mxu0 0.0
    %1860 = vmatprep.subr.mxu0 0.0
    %1861 = vmatpush1.msra.mxu0 0.0
    %1862 = vmatprep.subr.mxu0 0.0
    %1863 = vmatpush1.msra.mxu0 0.0
    %1864 = vmatprep.subr.mxu0 0.0
    %1865 = vmatpush1.msra.mxu0 0.0
    %1866 = vmatprep.subr.mxu0 0.0
    %1867 = vmatpush1.msra.mxu0 0.0
    %1868 = vmatprep.subr.mxu0 0.0
    %1869 = vmatpush1.msra.mxu0 0.0
    %1870 = vmatprep.subr.mxu0 0.0
    %1871 = vmatpush1.msra.mxu0 0.0
    %1872 = vmatprep.subr.mxu0 0.0
    %1873 = vmatpush1.msra.mxu0 0.0
    %1874 = vmatprep.subr.mxu0 0.0
    %1875 = vmatpush1.msra.mxu0 0.0
    %1876 = vmatprep.subr.mxu0 0.0
    %1877 = vmatpush1.msra.mxu0 0.0
    %1878 = vmatprep.subr.mxu0 0.0
    %1879 = vmatpush1.msra.mxu0 0.0
    %1880 = vmatprep.subr.mxu0 0.0
    %1881 = vmatpush1.msra.mxu0 0.0
    %1882 = vmatprep.subr.mxu0 0.0
    %1883 = vmatpush1.msra.mxu0 0.0
    %1884 = vmatprep.mubr.f32.mxu0 0.0
    %1885 = vmatmul.mubr.f32.gmra.mrb[0].mxu0 %v1748
    %v1886 = vpop.f32.mrb[0].mxu0
    %v1887 = vadd.f32 %v336, %v1886
    %v1888 = vpop.f32.mrb[0].mxu0
    %1889 = vdwg.mxu0
    %v1890 = vadd.f32 %v1817, %v1887
    %v1891 = vxor.u32 %v1890, 2147483648
    %v1892 = vmul.f32 %v1891, 1.442695
    %v1893 = vpow.pop %v1892
    %v1894 = vadd.f32 %v1893, 1.0
    %v1895 = vrcp.pop %v1894
    %v1896 = vmul.f32 1.0, %v1895
    %1898 = vrot.lane.b32.xlu0 %v1887, 64
    %v1899 = vpop.permute.xlu0 %1898
    %v1901 = vmul.f32 %v1896, %v1899
    %1903 = vrot.lane.b32.xlu0 %v1901, 64
    %v1904 = vpop.permute.xlu0 %1903
    %v1906 = vadd.f32 %v1817, %v1904
    %v1907 = vtanh.pop %v1906
    %v1908 = vsub.f32 1.0, %v1896
    %1910 = vrot.lane.b32.xlu0 %v1907, 96
    %v1911 = vpop.permute.xlu0 %1910
    %v1913 = vmul.f32 %v1908, %v1911
    %v1914 = vmul.f32 %v1896, %v1715
    %v1915 = vadd.f32 %v1913, %v1914
    %v1917 = vrot.slane %v710, 6
    %v1920 = vrot.slane %v911, 4
    %v1923 = vrot.slane %v1112, 2
    %v1926 = vrot.slane %v1514, 6
    %v1929 = vrot.slane %v1715, 4
    %v1932 = vrot.slane %v1915, 2
    %vm1934 = vcmask 1041408
    %v1935 = vsel %vm1934, %v509, %v1917
    %vm1936 = vcmask 1043456
    %v1937 = vsel %vm1936, %v1935, %v1920
    %vm1938 = vcmask 1045504
    %v1939 = vsel %vm1938, %v1937, %v1923
    %v1940 = vsel %vm1934, %v1313, %v1926
    %v1941 = vsel %vm1936, %v1940, %v1929
    %v1942 = vsel %vm1938, %v1941, %v1932
    %v1943 = vld [vmem:[%s7] sm:$0xff]
    %v1944 = vld [vmem:[%s7 + $0x8] sm:$0xff]
    %v1945 = vld [vmem:[%s7 + $0x10] sm:$0xff]
    %v1946 = vld [vmem:[%s7 + $0x18] sm:$0xff]
    %v1947 = vld [vmem:[%s7 + $0x20] sm:$0xff]
    %v1948 = vld [vmem:[%s7 + $0x28] sm:$0xff]
    %v1949 = vld [vmem:[%s7 + $0x30] sm:$0xff]
    %v1950 = vld [vmem:[%s7 + $0x38] sm:$0xff]
    %v1951 = vld [vmem:[%s8] sm:$0x3]
    %v1953 = vlaneseq
    %v1954 = vshrl.u32 %v1953, 7
    %v1955 = vsub.s32 0, %v1954
    %v1956 = vrot.slane %v1951, %v1955
    %v1957 = vlaneseq
    %v1958 = vshrl.u32 %v1957, 7
    %v1959 = vsub.s32 1, %v1958
    %v1960 = vrot.slane %v1951, %v1959
    %1965 = vrot.lane.b32.xlu0 %v1939, 96
    %v1966 = vpop.permute.xlu0 %1965
    %1967 = vrot.lane.b32.xlu0 %v1942, 96
    %v1968 = vpop.permute.xlu0 %1967
    %v1969 = vsel %vm151, %v1966, 0
    %v1971 = vsel %vm151, %v1968, 0
    %1973 = vmatprep.subr.mxu0 %v1944
    %1974 = vmatpush1.msra.mxu0 %v1943
    %1975 = vmatprep.subr.mxu0 %v1946
    %1976 = vmatpush1.msra.mxu0 %v1945
    %1977 = vmatprep.subr.mxu0 %v1948
    %1978 = vmatpush1.msra.mxu0 %v1947
    %1979 = vmatprep.subr.mxu0 %v1950
    %1980 = vmatpush1.msra.mxu0 %v1949
    %1981 = vmatprep.subr.mxu0 0.0
    %1982 = vmatpush1.msra.mxu0 0.0
    %1983 = vmatprep.subr.mxu0 0.0
    %1984 = vmatpush1.msra.mxu0 0.0
    %1985 = vmatprep.subr.mxu0 0.0
    %1986 = vmatpush1.msra.mxu0 0.0
    %1987 = vmatprep.subr.mxu0 0.0
    %1988 = vmatpush1.msra.mxu0 0.0
    %1989 = vmatprep.subr.mxu0 0.0
    %1990 = vmatpush1.msra.mxu0 0.0
    %1991 = vmatprep.subr.mxu0 0.0
    %1992 = vmatpush1.msra.mxu0 0.0
    %1993 = vmatprep.subr.mxu0 0.0
    %1994 = vmatpush1.msra.mxu0 0.0
    %1995 = vmatprep.subr.mxu0 0.0
    %1996 = vmatpush1.msra.mxu0 0.0
    %1997 = vmatprep.subr.mxu0 0.0
    %1998 = vmatpush1.msra.mxu0 0.0
    %1999 = vmatprep.subr.mxu0 0.0
    %2000 = vmatpush1.msra.mxu0 0.0
    %2001 = vmatprep.subr.mxu0 0.0
    %2002 = vmatpush1.msra.mxu0 0.0
    %2003 = vmatprep.subr.mxu0 0.0
    %2004 = vmatpush1.msra.mxu0 0.0
    %2005 = vmatprep.subr.mxu0 0.0
    %2006 = vmatpush1.msra.mxu0 0.0
    %2007 = vmatprep.subr.mxu0 0.0
    %2008 = vmatpush1.msra.mxu0 0.0
    %2009 = vmatprep.subr.mxu0 0.0
    %2010 = vmatpush1.msra.mxu0 0.0
    %2011 = vmatprep.subr.mxu0 0.0
    %2012 = vmatpush1.msra.mxu0 0.0
    %2013 = vmatprep.subr.mxu0 0.0
    %2014 = vmatpush1.msra.mxu0 0.0
    %2015 = vmatprep.subr.mxu0 0.0
    %2016 = vmatpush1.msra.mxu0 0.0
    %2017 = vmatprep.subr.mxu0 0.0
    %2018 = vmatpush1.msra.mxu0 0.0
    %2019 = vmatprep.subr.mxu0 0.0
    %2020 = vmatpush1.msra.mxu0 0.0
    %2021 = vmatprep.subr.mxu0 0.0
    %2022 = vmatpush1.msra.mxu0 0.0
    %2023 = vmatprep.subr.mxu0 0.0
    %2024 = vmatpush1.msra.mxu0 0.0
    %2025 = vmatprep.subr.mxu0 0.0
    %2026 = vmatpush1.msra.mxu0 0.0
    %2027 = vmatprep.subr.mxu0 0.0
    %2028 = vmatpush1.msra.mxu0 0.0
    %2029 = vmatprep.subr.mxu0 0.0
    %2030 = vmatpush1.msra.mxu0 0.0
    %2031 = vmatprep.subr.mxu0 0.0
    %2032 = vmatpush1.msra.mxu0 0.0
    %2033 = vmatprep.subr.mxu0 0.0
    %2034 = vmatpush1.msra.mxu0 0.0
    %2035 = vmatprep.subr.mxu0 0.0
    %2036 = vmatpush1.msra.mxu0 0.0
    %2037 = vmatprep.mubr.f32.mxu0 0.0
    %2038 = vmatmul.mubr.f32.gmra.mrb[0].mxu0 %v1969
    %v2039 = vpop.f32.mrb[0].mxu0
    %v2040 = vadd.f32 %v1956, %v2039
    %v2041 = vpop.f32.mrb[0].mxu0
    %v2042 = vadd.f32 %v1960, %v2041
    %2043 = vmatprep.mubr.f32.mxu0 0.0
    %2044 = vmatmul.mubr.f32.gmra.mrb[0].mxu0 %v1971
    %v2045 = vpop.f32.mrb[0].mxu0
    %v2046 = vadd.f32 %v1956, %v2045
    %v2047 = vpop.f32.mrb[0].mxu0
    %v2048 = vadd.f32 %v1960, %v2047
    %2049 = vdwg.mxu0
    %2050 = vst [vmem:[%s9] sm:$0xff] %v2040
    %2051 = vst [vmem:[%s9 + $0x8] sm:$0xff] %v2042
    %2052 = vst [vmem:[%s9 + $0x10] sm:$0xff] %v2046
    %2053 = vst [vmem:[%s9 + $0x18] sm:$0xff] %v2048
    %vm2054 = vcmask 254976
    %2055 = vst.msk [vmem:[#allocation4] sm:$0x3] %vm2054, %v1744
    %2056 = vrot.lane.b32.xlu0 %v1915, 96
    %v2057 = vpop.permute.xlu0 %2056
    %s2059 = scalar_lea.vmem [#allocation4], 2
    %2060 = vst.msk [vmem:[%s2059] sm:$0x3] %vm2054, %v2057
    // Predicated region
    $region34: #{seq2seq_decoder_forward.1} parent=1 // pred_check
      _
    $region35: #{seq2seq_decoder_forward.1} parent=1 // pred_check_branch
      %2062 = sbr.rel (0) target = $region37
    $region36: #{seq2seq_decoder_forward.1} parent=1 // pred_region
      _
    $region37: #{seq2seq_decoder_forward.1} parent=1 // pred_fallthru
      _
    // Predicated region
    $region38: #{seq2seq_decoder_forward.1} parent=1 // pred_check
      _
    $region39: #{seq2seq_decoder_forward.1} parent=1 // pred_check_branch
      %2064 = sbr.rel (0) target = $region41
    $region40: #{seq2seq_decoder_forward.1} parent=1 // pred_region
      %s2066 = ssub.s32 64, 64
      %2067 = vsyncadd [#allocation5], %s2066
      %s2068 = sshll.u32 [#allocation4], 4
      %s2069 = int_to_ptr.vmem [resolvable:$true] %s2068
      %2074 = dma.vmem_to_hbm [thread:$0]  %s2069, 64, %s10, [#allocation5], 32, 32, 2
    $region41: #{seq2seq_decoder_forward.1} parent=1 // pred_fallthru
      _
    // Predicated region
    $region42: #{seq2seq_decoder_forward.1} parent=1 // pred_check
      _
    $region43: #{seq2seq_decoder_forward.1} parent=1 // pred_check_branch
      %2076 = sbr.rel (0) target = $region45
    $region44: #{seq2seq_decoder_forward.1} parent=1 // pred_region
      _
    $region45: #{seq2seq_decoder_forward.1} parent=1 // pred_fallthru
      _
    // Predicated region
    $region46: #{seq2seq_decoder_forward.1} parent=1 // pred_check
      _
    $region47: #{seq2seq_decoder_forward.1} parent=1 // pred_check_branch
      %2078 = sbr.rel (0) target = $region49
    $region48: #{seq2seq_decoder_forward.1} parent=1 // pred_region
      %2079 = dma.done [#allocation5], 64
    $region49: #{seq2seq_decoder_forward.1} parent=1 // pred_fallthru
      _
    %2080 = vsyncpa [#allocation5], 1

</llo_original>
